<compile_context>
chip_gen: v6e
topology: v6e:2x2x1
jax: 0.10.0
libtpu: 0.0.40
codegen_flags: <defaults>
</compile_context>

<pallas_src>
import functools

import jax
import jax.numpy as jnp
import numpy as np
from jax.experimental import pallas as pl
from jax.experimental.pallas import tpu as pltpu


def _spatial_attention_kernel(w_ref, x_ref, o_ref, sum_ref, max_ref,
                              fpa_ref, fpm_ref, *, k, pad, C, TC, H, W):
    """Grid step = (batch b, channel-chunk c).

    w_ref   : SMEM, flattened conv weight (2*k*k,) f32, order [c, ki, kj]
    x_ref   : VMEM block (1, TC, H*W)  -- one lane-dense channel chunk of one image
    o_ref   : VMEM block (1, 1, H*W)   -- resident across the channel axis
    sum_ref : VMEM scratch (1, H*W) f32 -- running channel sum
    max_ref : VMEM scratch (1, H*W) f32 -- running channel max
    fpa_ref : VMEM scratch (1, L)  f32 -- zero-padded flat mean map (L = H*W + 2*pad*(W+1))
    fpm_ref : VMEM scratch (1, L)  f32 -- zero-padded flat max  map
    """
    c_idx = pl.program_id(1)
    n_c = pl.num_programs(1)
    HW = H * W
    OFF = pad * W + pad          # start of the image interior inside the flat padded buffers
    rem = C % TC                 # static Python int

    # Vectorized sum/max over this chunk's channels (sublane-axis reduction).
    v = x_ref[0].astype(jnp.float32)                      # (TC, HW)
    if rem:
        # Last chunk is ragged: mask the out-of-range channel rows.
        nvalid = jnp.where(c_idx == n_c - 1, rem, TC)
        rid = jax.lax.broadcasted_iota(jnp.int32, (TC, 1), 0)
        valid = rid < nvalid                              # (TC, 1), broadcasts over lanes
        s = jnp.sum(jnp.where(valid, v, 0.0), axis=0, keepdims=True)
        m = jnp.max(jnp.where(valid, v, -jnp.inf), axis=0, keepdims=True)
    else:
        s = jnp.sum(v, axis=0, keepdims=True)             # (1, HW)
        m = jnp.max(v, axis=0, keepdims=True)             # (1, HW)

    @pl.when(c_idx == 0)
    def _init():
        sum_ref[...] = s
        max_ref[...] = m
        # Zero the padded conv buffers once per image: the halo is never overwritten
        # and the interior is fully rewritten at finalize.  Kept per-image (not per
        # kernel invocation) so it stays correct when the batch axis is sharded
        # across TensorCores, each with its own scratch.
        fpa_ref[...] = jnp.zeros_like(fpa_ref)
        fpm_ref[...] = jnp.zeros_like(fpm_ref)

    @pl.when(c_idx > 0)
    def _accumulate():
        sum_ref[...] = sum_ref[...] + s
        max_ref[...] = jnp.maximum(max_ref[...], m)

    @pl.when(c_idx == n_c - 1)
    def _finalize():
        inv_c = 1.0 / C
        # Write the image interior of the flat padded maps (row halo stays zero).
        fpa_ref[:, pl.ds(OFF, HW)] = sum_ref[...] * inv_c     # channel mean
        fpm_ref[:, pl.ds(OFF, HW)] = max_ref[...]             # channel max

        # 2-D conv on the flattened image: tap (c, ki, kj) is a constant lane
        # offset (ki-pad)*W + (kj-pad); the row halo is handled by the zero
        # padding, the column wrap by one mask per kj (k selects total).
        col = jax.lax.broadcasted_iota(jnp.int32, (1, HW), 1) % W
        acc = jnp.zeros((1, HW), jnp.float32)
        for kj in range(k):
            dj = kj - pad
            part = jnp.zeros((1, HW), jnp.float32)
            for ki in range(k):
                off = OFF + (ki - pad) * W + dj               # static flat tap offset
                part = part + w_ref[0 * k * k + ki * k + kj] * fpa_ref[:, pl.ds(off, HW)]
                part = part + w_ref[1 * k * k + ki * k + kj] * fpm_ref[:, pl.ds(off, HW)]
            jc = col + dj
            acc = acc + jnp.where((jc >= 0) & (jc < W), part, 0.0)

        o_ref[0] = jax.nn.sigmoid(acc).astype(o_ref.dtype)


def spatial_attention(x, weight, *, c_block_bytes=None):
    """x: (B, C, H, W), weight: (1, 2, k, k) float32 -> (B, 1, H, W)."""
    B, C, H, W = x.shape
    k = weight.shape[-1]
    pad = k // 2                       # matches PyTorch for odd kernel_size
    HW = H * W
    L = HW + 2 * pad * (W + 1)         # flat padded map length (covers every conv tap)
    w_flat = weight.reshape(-1).astype(jnp.float32)   # (2*k*k,)

    itemsize = jnp.dtype(x.dtype).itemsize

    try:
        vmem_cap = int(pltpu.get_tpu_info().vmem_capacity_bytes)
    except Exception:
        vmem_cap = 128 * 1024 * 1024

    if c_block_bytes is None:
        # ~6 MiB chunks on 64 MiB-VMEM parts (v7x), ~12 MiB on 128 MiB parts (v5e/v6e):
        # big enough to amortize the ~0.35us/step overhead, small enough to leave
        # room for double buffering + f32 reduction temps.
        c_block_bytes = (6 * 1024 * 1024 if vmem_cap <= 64 * 1024 * 1024
                         else 12 * 1024 * 1024)

    # Channel chunk: whole C if it fits, otherwise the largest sublane-aligned
    # (multiple-of-8) chunk within budget.  Ragged C handled in-kernel (no TC|C needed).
    row_bytes = HW * itemsize
    max_tc = max(1, c_block_bytes // row_bytes)
    if max_tc >= C:
        TC = C
    else:
        TC = max(8, (max_tc // 8) * 8)
        if TC >= C:
            TC = C
    n_c = -(-C // TC)

    blk_bytes = TC * HW * itemsize
    est = (2 * blk_bytes                # x chunk (double-buffered)
           + TC * HW * 4                # f32 upcast temp of the chunk / slack
           + 2 * HW * itemsize          # output block (double-buffered)
           + 2 * HW * 4                 # sum / max accumulators
           + 2 * L * 4)                 # flat padded conv buffers
    ceiling = max(vmem_cap - 12 * 1024 * 1024, 16 * 1024 * 1024)  # headroom, esp. v7x
    vmem_limit_bytes = int(min(max(2 * est, 32 * 1024 * 1024), ceiling))

    x_flat = x.reshape(B, C, HW)        # lane-dense spatial layout (free XLA reshape)

    x_spec_kwargs = {}
    if n_c >= 4 and blk_bytes <= 2 * 1024 * 1024:
        # Many small chunks: a third buffer keeps the HBM read streaming.
        x_spec_kwargs["pipeline_mode"] = pl.Buffered(3)
    x_spec = pl.BlockSpec((1, TC, HW), lambda b, c: (b, c, 0), **x_spec_kwargs)

    kernel = functools.partial(_spatial_attention_kernel,
                               k=k, pad=pad, C=C, TC=TC, H=H, W=W)
    out_flat = pl.pallas_call(
        kernel,
        out_shape=jax.ShapeDtypeStruct((B, 1, HW), x.dtype),
        grid=(B, n_c),
        in_specs=[
            pl.BlockSpec(memory_space=pltpu.MemorySpace.SMEM),   # conv weights
            x_spec,                                              # lane-dense channel chunk
        ],
        # Output block index is constant along the (arbitrary) channel axis, so the
        # block stays resident and is written exactly once, at the last channel step.
        out_specs=pl.BlockSpec((1, 1, HW), lambda b, c: (b, 0, 0)),
        scratch_shapes=[
            pltpu.VMEM((1, HW), jnp.float32),   # running channel sum
            pltpu.VMEM((1, HW), jnp.float32),   # running channel max
            pltpu.VMEM((1, L), jnp.float32),    # zero-padded flat mean map
            pltpu.VMEM((1, L), jnp.float32),    # zero-padded flat max map
        ],
        compiler_params=pltpu.CompilerParams(
            dimension_semantics=("parallel", "arbitrary"),
            vmem_limit_bytes=vmem_limit_bytes,
        ),
    )(w_flat, x_flat)
    return out_flat.reshape(B, 1, H, W)


if __name__ == "__main__":
    key = jax.random.PRNGKey(0)
    kx, kw = jax.random.split(key)

    B, C, H, W = 2, 4, 16, 16
    kernel_size = 7

    x = jax.random.normal(kx, (B, C, H, W), dtype=jnp.float32)
    # Deterministic synthetic conv weight, shape (out=1, in=2, k, k), no bias.
    weight = jax.random.normal(kw, (1, 2, kernel_size, kernel_size), dtype=jnp.float32) * 0.1

    out = spatial_attention(x, weight)
    out = jax.block_until_ready(out)

    # Pure-JAX reference for correctness.
    avg = jnp.mean(x, axis=1, keepdims=True)
    mx = jnp.max(x, axis=1, keepdims=True)
    feat = jnp.concatenate([avg, mx], axis=1)
    ref = jax.lax.conv_general_dilated(
        feat, weight, window_strides=(1, 1),
        padding=[(kernel_size // 2, kernel_size // 2)] * 2,
        dimension_numbers=("NCHW", "OIHW", "NCHW"))
    ref = jax.nn.sigmoid(ref)

    np.testing.assert_allclose(np.asarray(out), np.asarray(ref), rtol=1e-5, atol=1e-5)
    assert out.shape == (B, 1, H, W)
    print("KERNEL_OK")
</pallas_src>

<mosaic_0001>
module attributes {stable_mosaic.version = 11 : i64} {
  func.func @_spatial_attention_kernel(%arg0: i32, %arg1: i32, %arg2: memref<98xf32, #tpu.memory_space<smem>>, %arg3: memref<1x4x256xf32, #tpu.memory_space<vmem>>, %arg4: memref<1x1x256xf32, #tpu.memory_space<vmem>>, %arg5: memref<1x256xf32, #tpu.memory_space<vmem>>, %arg6: memref<1x256xf32, #tpu.memory_space<vmem>>, %arg7: memref<1x358xf32, #tpu.memory_space<vmem>>, %arg8: memref<1x358xf32, #tpu.memory_space<vmem>>) attributes {dimension_semantics = [#tpu.dimension_semantics<parallel>, #tpu.dimension_semantics<arbitrary>], iteration_bounds = array<i64: 2, 1>, scalar_prefetch = 0 : i64, scratch_operands = 4 : i64, tpu.core_type = #tpu.core_type<tc>, window_params = [{transform_indices = @transform_0, window_bounds = array<i64: 98>}, {transform_indices = @transform_1, window_bounds = array<i64: 1, 4, 256>}, {transform_indices = @transform_2, window_bounds = array<i64: 1, 1, 256>}]} {
    %c0 = arith.constant 0 : index
    %c0_0 = arith.constant 0 : index
    %c0_1 = arith.constant 0 : index
    %0 = vector.load %arg3[%c0, %c0_0, %c0_1] : memref<1x4x256xf32, #tpu.memory_space<vmem>>, vector<1x4x256xf32>
    %1 = vector.shape_cast %0 : vector<1x4x256xf32> to vector<4x256xf32>
    %cst = arith.constant dense<0.000000e+00> : vector<256xf32>
    %2 = vector.multi_reduction <add>, %1, %cst [0] : vector<4x256xf32> to vector<256xf32>
    %3 = vector.shape_cast %2 : vector<256xf32> to vector<1x256xf32>
    %cst_2 = arith.constant dense<0xFF800000> : vector<256xf32>
    %4 = vector.multi_reduction <maximumf>, %1, %cst_2 [0] : vector<4x256xf32> to vector<256xf32>
    %5 = vector.shape_cast %4 : vector<256xf32> to vector<1x256xf32>
    %c0_i32 = arith.constant 0 : i32
    %6 = arith.cmpi eq, %arg1, %c0_i32 : i32
    %7 = arith.extui %6 : i1 to i32
    %c0_i32_3 = arith.constant 0 : i32
    %8 = arith.cmpi ne, %7, %c0_i32_3 : i32
    scf.if %8 {
      %c0_8 = arith.constant 0 : index
      %c0_9 = arith.constant 0 : index
      %15 = vector.load %arg5[%c0_8, %c0_9] : memref<1x256xf32, #tpu.memory_space<vmem>>, vector<1x256xf32>
      tpu.vector_store %arg5[%c0_8, %c0_9], %3 {strides = array<i32>} : memref<1x256xf32, #tpu.memory_space<vmem>>, vector<1x256xf32>,
      %c0_10 = arith.constant 0 : index
      %c0_11 = arith.constant 0 : index
      %16 = vector.load %arg6[%c0_10, %c0_11] : memref<1x256xf32, #tpu.memory_space<vmem>>, vector<1x256xf32>
      tpu.vector_store %arg6[%c0_10, %c0_11], %5 {strides = array<i32>} : memref<1x256xf32, #tpu.memory_space<vmem>>, vector<1x256xf32>,
      %cst_12 = arith.constant 0.000000e+00 : f32
      %17 = vector.broadcast %cst_12 : f32 to vector<1x358xf32>
      %c0_13 = arith.constant 0 : index
      %c0_14 = arith.constant 0 : index
      %18 = vector.load %arg7[%c0_13, %c0_14] : memref<1x358xf32, #tpu.memory_space<vmem>>, vector<1x358xf32>
      tpu.vector_store %arg7[%c0_13, %c0_14], %17 {strides = array<i32>} : memref<1x358xf32, #tpu.memory_space<vmem>>, vector<1x358xf32>,
      %cst_15 = arith.constant 0.000000e+00 : f32
      %19 = vector.broadcast %cst_15 : f32 to vector<1x358xf32>
      %c0_16 = arith.constant 0 : index
      %c0_17 = arith.constant 0 : index
      %20 = vector.load %arg8[%c0_16, %c0_17] : memref<1x358xf32, #tpu.memory_space<vmem>>, vector<1x358xf32>
      tpu.vector_store %arg8[%c0_16, %c0_17], %19 {strides = array<i32>} : memref<1x358xf32, #tpu.memory_space<vmem>>, vector<1x358xf32>,
    } else {
    }
    %c0_i32_4 = arith.constant 0 : i32
    %9 = arith.cmpi sgt, %arg1, %c0_i32_4 : i32
    %10 = arith.extui %9 : i1 to i32
    %c0_i32_5 = arith.constant 0 : i32
    %11 = arith.cmpi ne, %10, %c0_i32_5 : i32
    scf.if %11 {
      %c0_8 = arith.constant 0 : index
      %c0_9 = arith.constant 0 : index
      %15 = vector.load %arg5[%c0_8, %c0_9] : memref<1x256xf32, #tpu.memory_space<vmem>>, vector<1x256xf32>
      %16 = arith.addf %15, %3 : vector<1x256xf32>
      %c0_10 = arith.constant 0 : index
      %c0_11 = arith.constant 0 : index
      %17 = vector.load %arg5[%c0_10, %c0_11] : memref<1x256xf32, #tpu.memory_space<vmem>>, vector<1x256xf32>
      tpu.vector_store %arg5[%c0_10, %c0_11], %16 {strides = array<i32>} : memref<1x256xf32, #tpu.memory_space<vmem>>, vector<1x256xf32>,
      %c0_12 = arith.constant 0 : index
      %c0_13 = arith.constant 0 : index
      %18 = vector.load %arg6[%c0_12, %c0_13] : memref<1x256xf32, #tpu.memory_space<vmem>>, vector<1x256xf32>
      %19 = arith.maximumf %18, %5 : vector<1x256xf32>
      %c0_14 = arith.constant 0 : index
      %c0_15 = arith.constant 0 : index
      %20 = vector.load %arg6[%c0_14, %c0_15] : memref<1x256xf32, #tpu.memory_space<vmem>>, vector<1x256xf32>
      tpu.vector_store %arg6[%c0_14, %c0_15], %19 {strides = array<i32>} : memref<1x256xf32, #tpu.memory_space<vmem>>, vector<1x256xf32>,
    } else {
    }
    %c0_i32_6 = arith.constant 0 : i32
    %12 = arith.cmpi eq, %arg1, %c0_i32_6 : i32
    %13 = arith.extui %12 : i1 to i32
    %c0_i32_7 = arith.constant 0 : i32
    %14 = arith.cmpi ne, %13, %c0_i32_7 : i32
    scf.if %14 {
      %c0_8 = arith.constant 0 : index
      %c0_9 = arith.constant 0 : index
      %15 = vector.load %arg5[%c0_8, %c0_9] : memref<1x256xf32, #tpu.memory_space<vmem>>, vector<1x256xf32>
      %cst_10 = arith.constant 2.500000e-01 : f32
      %16 = vector.broadcast %cst_10 : f32 to vector<1x256xf32>
      %17 = arith.mulf %15, %16 : vector<1x256xf32>
      %c0_11 = arith.constant 0 : index
      %c51 = arith.constant 51 : index
      %18 = vector.load %arg7[%c0_11, %c51] : memref<1x358xf32, #tpu.memory_space<vmem>>, vector<1x256xf32>
      tpu.vector_store %arg7[%c0_11, %c51], %17 {strides = array<i32>} : memref<1x358xf32, #tpu.memory_space<vmem>>, vector<1x256xf32>,
      %c0_12 = arith.constant 0 : index
      %c0_13 = arith.constant 0 : index
      %19 = vector.load %arg6[%c0_12, %c0_13] : memref<1x256xf32, #tpu.memory_space<vmem>>, vector<1x256xf32>
      %c0_14 = arith.constant 0 : index
      %c51_15 = arith.constant 51 : index
      %20 = vector.load %arg8[%c0_14, %c51_15] : memref<1x358xf32, #tpu.memory_space<vmem>>, vector<1x256xf32>
      tpu.vector_store %arg8[%c0_14, %c51_15], %19 {strides = array<i32>} : memref<1x358xf32, #tpu.memory_space<vmem>>, vector<1x256xf32>,
      %21 = tpu.iota {dimensions = array<i32: 1>} : vector<1x256xi32>
      %c16_i32 = arith.constant 16 : i32
      %c0_i32_16 = arith.constant 0 : i32
      %22 = arith.cmpi eq, %c16_i32, %c0_i32_16 : i32
      %c1_i32 = arith.constant 1 : i32
      %23 = arith.select %22, %c1_i32, %c16_i32 : i32
      %24 = vector.broadcast %23 : i32 to vector<1x256xi32>
      %25 = arith.remsi %21, %24 : vector<1x256xi32>
      %c0_i32_17 = arith.constant 0 : i32
      %26 = vector.broadcast %c0_i32_17 : i32 to vector<1x256xi32>
      %27 = arith.cmpi ne, %25, %26 : vector<1x256xi32>
      %c0_i32_18 = arith.constant 0 : i32
      %28 = vector.broadcast %c0_i32_18 : i32 to vector<1x256xi32>
      %29 = arith.cmpi slt, %25, %28 : vector<1x256xi32>
      %c0_i32_19 = arith.constant 0 : i32
      %30 = arith.cmpi slt, %23, %c0_i32_19 : i32
      %31 = vector.broadcast %30 : i1 to vector<1x256xi1>
      %32 = vector.broadcast %31 : vector<1x256xi1> to vector<1x256xi1>
      %33 = arith.xori %29, %32 : vector<1x256xi1>
      %34 = arith.andi %33, %27 : vector<1x256xi1>
      %35 = vector.broadcast %23 : i32 to vector<1x256xi32>
      %36 = arith.addi %25, %35 : vector<1x256xi32>
      %37 = arith.select %34, %36, %25 : vector<1x256xi1>, vector<1x256xi32>
      %cst_20 = arith.constant 0.000000e+00 : f32
      %38 = vector.broadcast %cst_20 : f32 to vector<1x256xf32>
      %cst_21 = arith.constant 0.000000e+00 : f32
      %39 = vector.broadcast %cst_21 : f32 to vector<1x256xf32>
      %c0_22 = arith.constant 0 : index
      %40 = memref.load %arg2[%c0_22] : memref<98xf32, #tpu.memory_space<smem>>
      %c0_23 = arith.constant 0 : index
      %c0_24 = arith.constant 0 : index
      %41 = vector.load %arg7[%c0_23, %c0_24] : memref<1x358xf32, #tpu.memory_space<vmem>>, vector<1x256xf32>
      %42 = vector.broadcast %40 : f32 to vector<1x256xf32>
      %43 = arith.mulf %42, %41 : vector<1x256xf32>
      %44 = arith.addf %39, %43 : vector<1x256xf32>
      %c49 = arith.constant 49 : index
      %45 = memref.load %arg2[%c49] : memref<98xf32, #tpu.memory_space<smem>>
      %c0_25 = arith.constant 0 : index
      %c0_26 = arith.constant 0 : index
      %46 = vector.load %arg8[%c0_25, %c0_26] : memref<1x358xf32, #tpu.memory_space<vmem>>, vector<1x256xf32>
      %47 = vector.broadcast %45 : f32 to vector<1x256xf32>
      %48 = arith.mulf %47, %46 : vector<1x256xf32>
      %49 = arith.addf %44, %48 : vector<1x256xf32>
      %c7 = arith.constant 7 : index
      %50 = memref.load %arg2[%c7] : memref<98xf32, #tpu.memory_space<smem>>
      %c0_27 = arith.constant 0 : index
      %c16 = arith.constant 16 : index
      %51 = vector.load %arg7[%c0_27, %c16] : memref<1x358xf32, #tpu.memory_space<vmem>>, vector<1x256xf32>
      %52 = vector.broadcast %50 : f32 to vector<1x256xf32>
      %53 = arith.mulf %52, %51 : vector<1x256xf32>
      %54 = arith.addf %49, %53 : vector<1x256xf32>
      %c56 = arith.constant 56 : index
      %55 = memref.load %arg2[%c56] : memref<98xf32, #tpu.memory_space<smem>>
      %c0_28 = arith.constant 0 : index
      %c16_29 = arith.constant 16 : index
      %56 = vector.load %arg8[%c0_28, %c16_29] : memref<1x358xf32, #tpu.memory_space<vmem>>, vector<1x256xf32>
      %57 = vector.broadcast %55 : f32 to vector<1x256xf32>
      %58 = arith.mulf %57, %56 : vector<1x256xf32>
      %59 = arith.addf %54, %58 : vector<1x256xf32>
      %c14 = arith.constant 14 : index
      %60 = memref.load %arg2[%c14] : memref<98xf32, #tpu.memory_space<smem>>
      %c0_30 = arith.constant 0 : index
      %c32 = arith.constant 32 : index
      %61 = vector.load %arg7[%c0_30, %c32] : memref<1x358xf32, #tpu.memory_space<vmem>>, vector<1x256xf32>
      %62 = vector.broadcast %60 : f32 to vector<1x256xf32>
      %63 = arith.mulf %62, %61 : vector<1x256xf32>
      %64 = arith.addf %59, %63 : vector<1x256xf32>
      %c63 = arith.constant 63 : index
      %65 = memref.load %arg2[%c63] : memref<98xf32, #tpu.memory_space<smem>>
      %c0_31 = arith.constant 0 : index
      %c32_32 = arith.constant 32 : index
      %66 = vector.load %arg8[%c0_31, %c32_32] : memref<1x358xf32, #tpu.memory_space<vmem>>, vector<1x256xf32>
      %67 = vector.broadcast %65 : f32 to vector<1x256xf32>
      %68 = arith.mulf %67, %66 : vector<1x256xf32>
      %69 = arith.addf %64, %68 : vector<1x256xf32>
      %c21 = arith.constant 21 : index
      %70 = memref.load %arg2[%c21] : memref<98xf32, #tpu.memory_space<smem>>
      %c0_33 = arith.constant 0 : index
      %c48 = arith.constant 48 : index
      %71 = vector.load %arg7[%c0_33, %c48] : memref<1x358xf32, #tpu.memory_space<vmem>>, vector<1x256xf32>
      %72 = vector.broadcast %70 : f32 to vector<1x256xf32>
      %73 = arith.mulf %72, %71 : vector<1x256xf32>
      %74 = arith.addf %69, %73 : vector<1x256xf32>
      %c70 = arith.constant 70 : index
      %75 = memref.load %arg2[%c70] : memref<98xf32, #tpu.memory_space<smem>>
      %c0_34 = arith.constant 0 : index
      %c48_35 = arith.constant 48 : index
      %76 = vector.load %arg8[%c0_34, %c48_35] : memref<1x358xf32, #tpu.memory_space<vmem>>, vector<1x256xf32>
      %77 = vector.broadcast %75 : f32 to vector<1x256xf32>
      %78 = arith.mulf %77, %76 : vector<1x256xf32>
      %79 = arith.addf %74, %78 : vector<1x256xf32>
      %c28 = arith.constant 28 : index
      %80 = memref.load %arg2[%c28] : memref<98xf32, #tpu.memory_space<smem>>
      %c0_36 = arith.constant 0 : index
      %c64 = arith.constant 64 : index
      %81 = vector.load %arg7[%c0_36, %c64] : memref<1x358xf32, #tpu.memory_space<vmem>>, vector<1x256xf32>
      %82 = vector.broadcast %80 : f32 to vector<1x256xf32>
      %83 = arith.mulf %82, %81 : vector<1x256xf32>
      %84 = arith.addf %79, %83 : vector<1x256xf32>
      %c77 = arith.constant 77 : index
      %85 = memref.load %arg2[%c77] : memref<98xf32, #tpu.memory_space<smem>>
      %c0_37 = arith.constant 0 : index
      %c64_38 = arith.constant 64 : index
      %86 = vector.load %arg8[%c0_37, %c64_38] : memref<1x358xf32, #tpu.memory_space<vmem>>, vector<1x256xf32>
      %87 = vector.broadcast %85 : f32 to vector<1x256xf32>
      %88 = arith.mulf %87, %86 : vector<1x256xf32>
      %89 = arith.addf %84, %88 : vector<1x256xf32>
      %c35 = arith.constant 35 : index
      %90 = memref.load %arg2[%c35] : memref<98xf32, #tpu.memory_space<smem>>
      %c0_39 = arith.constant 0 : index
      %c80 = arith.constant 80 : index
      %91 = vector.load %arg7[%c0_39, %c80] : memref<1x358xf32, #tpu.memory_space<vmem>>, vector<1x256xf32>
      %92 = vector.broadcast %90 : f32 to vector<1x256xf32>
      %93 = arith.mulf %92, %91 : vector<1x256xf32>
      %94 = arith.addf %89, %93 : vector<1x256xf32>
      %c84 = arith.constant 84 : index
      %95 = memref.load %arg2[%c84] : memref<98xf32, #tpu.memory_space<smem>>
      %c0_40 = arith.constant 0 : index
      %c80_41 = arith.constant 80 : index
      %96 = vector.load %arg8[%c0_40, %c80_41] : memref<1x358xf32, #tpu.memory_space<vmem>>, vector<1x256xf32>
      %97 = vector.broadcast %95 : f32 to vector<1x256xf32>
      %98 = arith.mulf %97, %96 : vector<1x256xf32>
      %99 = arith.addf %94, %98 : vector<1x256xf32>
      %c42 = arith.constant 42 : index
      %100 = memref.load %arg2[%c42] : memref<98xf32, #tpu.memory_space<smem>>
      %c0_42 = arith.constant 0 : index
      %c96 = arith.constant 96 : index
      %101 = vector.load %arg7[%c0_42, %c96] : memref<1x358xf32, #tpu.memory_space<vmem>>, vector<1x256xf32>
      %102 = vector.broadcast %100 : f32 to vector<1x256xf32>
      %103 = arith.mulf %102, %101 : vector<1x256xf32>
      %104 = arith.addf %99, %103 : vector<1x256xf32>
      %c91 = arith.constant 91 : index
      %105 = memref.load %arg2[%c91] : memref<98xf32, #tpu.memory_space<smem>>
      %c0_43 = arith.constant 0 : index
      %c96_44 = arith.constant 96 : index
      %106 = vector.load %arg8[%c0_43, %c96_44] : memref<1x358xf32, #tpu.memory_space<vmem>>, vector<1x256xf32>
      %107 = vector.broadcast %105 : f32 to vector<1x256xf32>
      %108 = arith.mulf %107, %106 : vector<1x256xf32>
      %109 = arith.addf %104, %108 : vector<1x256xf32>
      %c-3_i32 = arith.constant -3 : i32
      %110 = vector.broadcast %c-3_i32 : i32 to vector<1x256xi32>
      %111 = arith.addi %37, %110 : vector<1x256xi32>
      %c0_i32_45 = arith.constant 0 : i32
      %112 = vector.broadcast %c0_i32_45 : i32 to vector<1x256xi32>
      %113 = arith.cmpi sge, %111, %112 : vector<1x256xi32>
      %c16_i32_46 = arith.constant 16 : i32
      %114 = vector.broadcast %c16_i32_46 : i32 to vector<1x256xi32>
      %115 = arith.cmpi slt, %111, %114 : vector<1x256xi32>
      %116 = arith.andi %113, %115 : vector<1x256xi1>
      %cst_47 = arith.constant 0.000000e+00 : f32
      %117 = vector.broadcast %cst_47 : f32 to vector<1x256xf32>
      %118 = arith.select %116, %109, %117 : vector<1x256xi1>, vector<1x256xf32>
      %119 = arith.addf %38, %118 : vector<1x256xf32>
      %cst_48 = arith.constant 0.000000e+00 : f32
      %120 = vector.broadcast %cst_48 : f32 to vector<1x256xf32>
      %c1 = arith.constant 1 : index
      %121 = memref.load %arg2[%c1] : memref<98xf32, #tpu.memory_space<smem>>
      %c0_49 = arith.constant 0 : index
      %c1_50 = arith.constant 1 : index
      %122 = vector.load %arg7[%c0_49, %c1_50] : memref<1x358xf32, #tpu.memory_space<vmem>>, vector<1x256xf32>
      %123 = vector.broadcast %121 : f32 to vector<1x256xf32>
      %124 = arith.mulf %123, %122 : vector<1x256xf32>
      %125 = arith.addf %120, %124 : vector<1x256xf32>
      %c50 = arith.constant 50 : index
      %126 = memref.load %arg2[%c50] : memref<98xf32, #tpu.memory_space<smem>>
      %c0_51 = arith.constant 0 : index
      %c1_52 = arith.constant 1 : index
      %127 = vector.load %arg8[%c0_51, %c1_52] : memref<1x358xf32, #tpu.memory_space<vmem>>, vector<1x256xf32>
      %128 = vector.broadcast %126 : f32 to vector<1x256xf32>
      %129 = arith.mulf %128, %127 : vector<1x256xf32>
      %130 = arith.addf %125, %129 : vector<1x256xf32>
      %c8 = arith.constant 8 : index
      %131 = memref.load %arg2[%c8] : memref<98xf32, #tpu.memory_space<smem>>
      %c0_53 = arith.constant 0 : index
      %c17 = arith.constant 17 : index
      %132 = vector.load %arg7[%c0_53, %c17] : memref<1x358xf32, #tpu.memory_space<vmem>>, vector<1x256xf32>
      %133 = vector.broadcast %131 : f32 to vector<1x256xf32>
      %134 = arith.mulf %133, %132 : vector<1x256xf32>
      %135 = arith.addf %130, %134 : vector<1x256xf32>
      %c57 = arith.constant 57 : index
      %136 = memref.load %arg2[%c57] : memref<98xf32, #tpu.memory_space<smem>>
      %c0_54 = arith.constant 0 : index
      %c17_55 = arith.constant 17 : index
      %137 = vector.load %arg8[%c0_54, %c17_55] : memref<1x358xf32, #tpu.memory_space<vmem>>, vector<1x256xf32>
      %138 = vector.broadcast %136 : f32 to vector<1x256xf32>
      %139 = arith.mulf %138, %137 : vector<1x256xf32>
      %140 = arith.addf %135, %139 : vector<1x256xf32>
      %c15 = arith.constant 15 : index
      %141 = memref.load %arg2[%c15] : memref<98xf32, #tpu.memory_space<smem>>
      %c0_56 = arith.constant 0 : index
      %c33 = arith.constant 33 : index
      %142 = vector.load %arg7[%c0_56, %c33] : memref<1x358xf32, #tpu.memory_space<vmem>>, vector<1x256xf32>
      %143 = vector.broadcast %141 : f32 to vector<1x256xf32>
      %144 = arith.mulf %143, %142 : vector<1x256xf32>
      %145 = arith.addf %140, %144 : vector<1x256xf32>
      %c64_57 = arith.constant 64 : index
      %146 = memref.load %arg2[%c64_57] : memref<98xf32, #tpu.memory_space<smem>>
      %c0_58 = arith.constant 0 : index
      %c33_59 = arith.constant 33 : index
      %147 = vector.load %arg8[%c0_58, %c33_59] : memref<1x358xf32, #tpu.memory_space<vmem>>, vector<1x256xf32>
      %148 = vector.broadcast %146 : f32 to vector<1x256xf32>
      %149 = arith.mulf %148, %147 : vector<1x256xf32>
      %150 = arith.addf %145, %149 : vector<1x256xf32>
      %c22 = arith.constant 22 : index
      %151 = memref.load %arg2[%c22] : memref<98xf32, #tpu.memory_space<smem>>
      %c0_60 = arith.constant 0 : index
      %c49_61 = arith.constant 49 : index
      %152 = vector.load %arg7[%c0_60, %c49_61] : memref<1x358xf32, #tpu.memory_space<vmem>>, vector<1x256xf32>
      %153 = vector.broadcast %151 : f32 to vector<1x256xf32>
      %154 = arith.mulf %153, %152 : vector<1x256xf32>
      %155 = arith.addf %150, %154 : vector<1x256xf32>
      %c71 = arith.constant 71 : index
      %156 = memref.load %arg2[%c71] : memref<98xf32, #tpu.memory_space<smem>>
      %c0_62 = arith.constant 0 : index
      %c49_63 = arith.constant 49 : index
      %157 = vector.load %arg8[%c0_62, %c49_63] : memref<1x358xf32, #tpu.memory_space<vmem>>, vector<1x256xf32>
      %158 = vector.broadcast %156 : f32 to vector<1x256xf32>
      %159 = arith.mulf %158, %157 : vector<1x256xf32>
      %160 = arith.addf %155, %159 : vector<1x256xf32>
      %c29 = arith.constant 29 : index
      %161 = memref.load %arg2[%c29] : memref<98xf32, #tpu.memory_space<smem>>
      %c0_64 = arith.constant 0 : index
      %c65 = arith.constant 65 : index
      %162 = vector.load %arg7[%c0_64, %c65] : memref<1x358xf32, #tpu.memory_space<vmem>>, vector<1x256xf32>
      %163 = vector.broadcast %161 : f32 to vector<1x256xf32>
      %164 = arith.mulf %163, %162 : vector<1x256xf32>
      %165 = arith.addf %160, %164 : vector<1x256xf32>
      %c78 = arith.constant 78 : index
      %166 = memref.load %arg2[%c78] : memref<98xf32, #tpu.memory_space<smem>>
      %c0_65 = arith.constant 0 : index
      %c65_66 = arith.constant 65 : index
      %167 = vector.load %arg8[%c0_65, %c65_66] : memref<1x358xf32, #tpu.memory_space<vmem>>, vector<1x256xf32>
      %168 = vector.broadcast %166 : f32 to vector<1x256xf32>
      %169 = arith.mulf %168, %167 : vector<1x256xf32>
      %170 = arith.addf %165, %169 : vector<1x256xf32>
      %c36 = arith.constant 36 : index
      %171 = memref.load %arg2[%c36] : memref<98xf32, #tpu.memory_space<smem>>
      %c0_67 = arith.constant 0 : index
      %c81 = arith.constant 81 : index
      %172 = vector.load %arg7[%c0_67, %c81] : memref<1x358xf32, #tpu.memory_space<vmem>>, vector<1x256xf32>
      %173 = vector.broadcast %171 : f32 to vector<1x256xf32>
      %174 = arith.mulf %173, %172 : vector<1x256xf32>
      %175 = arith.addf %170, %174 : vector<1x256xf32>
      %c85 = arith.constant 85 : index
      %176 = memref.load %arg2[%c85] : memref<98xf32, #tpu.memory_space<smem>>
      %c0_68 = arith.constant 0 : index
      %c81_69 = arith.constant 81 : index
      %177 = vector.load %arg8[%c0_68, %c81_69] : memref<1x358xf32, #tpu.memory_space<vmem>>, vector<1x256xf32>
      %178 = vector.broadcast %176 : f32 to vector<1x256xf32>
      %179 = arith.mulf %178, %177 : vector<1x256xf32>
      %180 = arith.addf %175, %179 : vector<1x256xf32>
      %c43 = arith.constant 43 : index
      %181 = memref.load %arg2[%c43] : memref<98xf32, #tpu.memory_space<smem>>
      %c0_70 = arith.constant 0 : index
      %c97 = arith.constant 97 : index
      %182 = vector.load %arg7[%c0_70, %c97] : memref<1x358xf32, #tpu.memory_space<vmem>>, vector<1x256xf32>
      %183 = vector.broadcast %181 : f32 to vector<1x256xf32>
      %184 = arith.mulf %183, %182 : vector<1x256xf32>
      %185 = arith.addf %180, %184 : vector<1x256xf32>
      %c92 = arith.constant 92 : index
      %186 = memref.load %arg2[%c92] : memref<98xf32, #tpu.memory_space<smem>>
      %c0_71 = arith.constant 0 : index
      %c97_72 = arith.constant 97 : index
      %187 = vector.load %arg8[%c0_71, %c97_72] : memref<1x358xf32, #tpu.memory_space<vmem>>, vector<1x256xf32>
      %188 = vector.broadcast %186 : f32 to vector<1x256xf32>
      %189 = arith.mulf %188, %187 : vector<1x256xf32>
      %190 = arith.addf %185, %189 : vector<1x256xf32>
      %c-2_i32 = arith.constant -2 : i32
      %191 = vector.broadcast %c-2_i32 : i32 to vector<1x256xi32>
      %192 = arith.addi %37, %191 : vector<1x256xi32>
      %c0_i32_73 = arith.constant 0 : i32
      %193 = vector.broadcast %c0_i32_73 : i32 to vector<1x256xi32>
      %194 = arith.cmpi sge, %192, %193 : vector<1x256xi32>
      %c16_i32_74 = arith.constant 16 : i32
      %195 = vector.broadcast %c16_i32_74 : i32 to vector<1x256xi32>
      %196 = arith.cmpi slt, %192, %195 : vector<1x256xi32>
      %197 = arith.andi %194, %196 : vector<1x256xi1>
      %cst_75 = arith.constant 0.000000e+00 : f32
      %198 = vector.broadcast %cst_75 : f32 to vector<1x256xf32>
      %199 = arith.select %197, %190, %198 : vector<1x256xi1>, vector<1x256xf32>
      %200 = arith.addf %119, %199 : vector<1x256xf32>
      %cst_76 = arith.constant 0.000000e+00 : f32
      %201 = vector.broadcast %cst_76 : f32 to vector<1x256xf32>
      %c2 = arith.constant 2 : index
      %202 = memref.load %arg2[%c2] : memref<98xf32, #tpu.memory_space<smem>>
      %c0_77 = arith.constant 0 : index
      %c2_78 = arith.constant 2 : index
      %203 = vector.load %arg7[%c0_77, %c2_78] : memref<1x358xf32, #tpu.memory_space<vmem>>, vector<1x256xf32>
      %204 = vector.broadcast %202 : f32 to vector<1x256xf32>
      %205 = arith.mulf %204, %203 : vector<1x256xf32>
      %206 = arith.addf %201, %205 : vector<1x256xf32>
      %c51_79 = arith.constant 51 : index
      %207 = memref.load %arg2[%c51_79] : memref<98xf32, #tpu.memory_space<smem>>
      %c0_80 = arith.constant 0 : index
      %c2_81 = arith.constant 2 : index
      %208 = vector.load %arg8[%c0_80, %c2_81] : memref<1x358xf32, #tpu.memory_space<vmem>>, vector<1x256xf32>
      %209 = vector.broadcast %207 : f32 to vector<1x256xf32>
      %210 = arith.mulf %209, %208 : vector<1x256xf32>
      %211 = arith.addf %206, %210 : vector<1x256xf32>
      %c9 = arith.constant 9 : index
      %212 = memref.load %arg2[%c9] : memref<98xf32, #tpu.memory_space<smem>>
      %c0_82 = arith.constant 0 : index
      %c18 = arith.constant 18 : index
      %213 = vector.load %arg7[%c0_82, %c18] : memref<1x358xf32, #tpu.memory_space<vmem>>, vector<1x256xf32>
      %214 = vector.broadcast %212 : f32 to vector<1x256xf32>
      %215 = arith.mulf %214, %213 : vector<1x256xf32>
      %216 = arith.addf %211, %215 : vector<1x256xf32>
      %c58 = arith.constant 58 : index
      %217 = memref.load %arg2[%c58] : memref<98xf32, #tpu.memory_space<smem>>
      %c0_83 = arith.constant 0 : index
      %c18_84 = arith.constant 18 : index
      %218 = vector.load %arg8[%c0_83, %c18_84] : memref<1x358xf32, #tpu.memory_space<vmem>>, vector<1x256xf32>
      %219 = vector.broadcast %217 : f32 to vector<1x256xf32>
      %220 = arith.mulf %219, %218 : vector<1x256xf32>
      %221 = arith.addf %216, %220 : vector<1x256xf32>
      %c16_85 = arith.constant 16 : index
      %222 = memref.load %arg2[%c16_85] : memref<98xf32, #tpu.memory_space<smem>>
      %c0_86 = arith.constant 0 : index
      %c34 = arith.constant 34 : index
      %223 = vector.load %arg7[%c0_86, %c34] : memref<1x358xf32, #tpu.memory_space<vmem>>, vector<1x256xf32>
      %224 = vector.broadcast %222 : f32 to vector<1x256xf32>
      %225 = arith.mulf %224, %223 : vector<1x256xf32>
      %226 = arith.addf %221, %225 : vector<1x256xf32>
      %c65_87 = arith.constant 65 : index
      %227 = memref.load %arg2[%c65_87] : memref<98xf32, #tpu.memory_space<smem>>
      %c0_88 = arith.constant 0 : index
      %c34_89 = arith.constant 34 : index
      %228 = vector.load %arg8[%c0_88, %c34_89] : memref<1x358xf32, #tpu.memory_space<vmem>>, vector<1x256xf32>
      %229 = vector.broadcast %227 : f32 to vector<1x256xf32>
      %230 = arith.mulf %229, %228 : vector<1x256xf32>
      %231 = arith.addf %226, %230 : vector<1x256xf32>
      %c23 = arith.constant 23 : index
      %232 = memref.load %arg2[%c23] : memref<98xf32, #tpu.memory_space<smem>>
      %c0_90 = arith.constant 0 : index
      %c50_91 = arith.constant 50 : index
      %233 = vector.load %arg7[%c0_90, %c50_91] : memref<1x358xf32, #tpu.memory_space<vmem>>, vector<1x256xf32>
      %234 = vector.broadcast %232 : f32 to vector<1x256xf32>
      %235 = arith.mulf %234, %233 : vector<1x256xf32>
      %236 = arith.addf %231, %235 : vector<1x256xf32>
      %c72 = arith.constant 72 : index
      %237 = memref.load %arg2[%c72] : memref<98xf32, #tpu.memory_space<smem>>
      %c0_92 = arith.constant 0 : index
      %c50_93 = arith.constant 50 : index
      %238 = vector.load %arg8[%c0_92, %c50_93] : memref<1x358xf32, #tpu.memory_space<vmem>>, vector<1x256xf32>
      %239 = vector.broadcast %237 : f32 to vector<1x256xf32>
      %240 = arith.mulf %239, %238 : vector<1x256xf32>
      %241 = arith.addf %236, %240 : vector<1x256xf32>
      %c30 = arith.constant 30 : index
      %242 = memref.load %arg2[%c30] : memref<98xf32, #tpu.memory_space<smem>>
      %c0_94 = arith.constant 0 : index
      %c66 = arith.constant 66 : index
      %243 = vector.load %arg7[%c0_94, %c66] : memref<1x358xf32, #tpu.memory_space<vmem>>, vector<1x256xf32>
      %244 = vector.broadcast %242 : f32 to vector<1x256xf32>
      %245 = arith.mulf %244, %243 : vector<1x256xf32>
      %246 = arith.addf %241, %245 : vector<1x256xf32>
      %c79 = arith.constant 79 : index
      %247 = memref.load %arg2[%c79] : memref<98xf32, #tpu.memory_space<smem>>
      %c0_95 = arith.constant 0 : index
      %c66_96 = arith.constant 66 : index
      %248 = vector.load %arg8[%c0_95, %c66_96] : memref<1x358xf32, #tpu.memory_space<vmem>>, vector<1x256xf32>
      %249 = vector.broadcast %247 : f32 to vector<1x256xf32>
      %250 = arith.mulf %249, %248 : vector<1x256xf32>
      %251 = arith.addf %246, %250 : vector<1x256xf32>
      %c37 = arith.constant 37 : index
      %252 = memref.load %arg2[%c37] : memref<98xf32, #tpu.memory_space<smem>>
      %c0_97 = arith.constant 0 : index
      %c82 = arith.constant 82 : index
      %253 = vector.load %arg7[%c0_97, %c82] : memref<1x358xf32, #tpu.memory_space<vmem>>, vector<1x256xf32>
      %254 = vector.broadcast %252 : f32 to vector<1x256xf32>
      %255 = arith.mulf %254, %253 : vector<1x256xf32>
      %256 = arith.addf %251, %255 : vector<1x256xf32>
      %c86 = arith.constant 86 : index
      %257 = memref.load %arg2[%c86] : memref<98xf32, #tpu.memory_space<smem>>
      %c0_98 = arith.constant 0 : index
      %c82_99 = arith.constant 82 : index
      %258 = vector.load %arg8[%c0_98, %c82_99] : memref<1x358xf32, #tpu.memory_space<vmem>>, vector<1x256xf32>
      %259 = vector.broadcast %257 : f32 to vector<1x256xf32>
      %260 = arith.mulf %259, %258 : vector<1x256xf32>
      %261 = arith.addf %256, %260 : vector<1x256xf32>
      %c44 = arith.constant 44 : index
      %262 = memref.load %arg2[%c44] : memref<98xf32, #tpu.memory_space<smem>>
      %c0_100 = arith.constant 0 : index
      %c98 = arith.constant 98 : index
      %263 = vector.load %arg7[%c0_100, %c98] : memref<1x358xf32, #tpu.memory_space<vmem>>, vector<1x256xf32>
      %264 = vector.broadcast %262 : f32 to vector<1x256xf32>
      %265 = arith.mulf %264, %263 : vector<1x256xf32>
      %266 = arith.addf %261, %265 : vector<1x256xf32>
      %c93 = arith.constant 93 : index
      %267 = memref.load %arg2[%c93] : memref<98xf32, #tpu.memory_space<smem>>
      %c0_101 = arith.constant 0 : index
      %c98_102 = arith.constant 98 : index
      %268 = vector.load %arg8[%c0_101, %c98_102] : memref<1x358xf32, #tpu.memory_space<vmem>>, vector<1x256xf32>
      %269 = vector.broadcast %267 : f32 to vector<1x256xf32>
      %270 = arith.mulf %269, %268 : vector<1x256xf32>
      %271 = arith.addf %266, %270 : vector<1x256xf32>
      %c-1_i32 = arith.constant -1 : i32
      %272 = vector.broadcast %c-1_i32 : i32 to vector<1x256xi32>
      %273 = arith.addi %37, %272 : vector<1x256xi32>
      %c0_i32_103 = arith.constant 0 : i32
      %274 = vector.broadcast %c0_i32_103 : i32 to vector<1x256xi32>
      %275 = arith.cmpi sge, %273, %274 : vector<1x256xi32>
      %c16_i32_104 = arith.constant 16 : i32
      %276 = vector.broadcast %c16_i32_104 : i32 to vector<1x256xi32>
      %277 = arith.cmpi slt, %273, %276 : vector<1x256xi32>
      %278 = arith.andi %275, %277 : vector<1x256xi1>
      %cst_105 = arith.constant 0.000000e+00 : f32
      %279 = vector.broadcast %cst_105 : f32 to vector<1x256xf32>
      %280 = arith.select %278, %271, %279 : vector<1x256xi1>, vector<1x256xf32>
      %281 = arith.addf %200, %280 : vector<1x256xf32>
      %cst_106 = arith.constant 0.000000e+00 : f32
      %282 = vector.broadcast %cst_106 : f32 to vector<1x256xf32>
      %c3 = arith.constant 3 : index
      %283 = memref.load %arg2[%c3] : memref<98xf32, #tpu.memory_space<smem>>
      %c0_107 = arith.constant 0 : index
      %c3_108 = arith.constant 3 : index
      %284 = vector.load %arg7[%c0_107, %c3_108] : memref<1x358xf32, #tpu.memory_space<vmem>>, vector<1x256xf32>
      %285 = vector.broadcast %283 : f32 to vector<1x256xf32>
      %286 = arith.mulf %285, %284 : vector<1x256xf32>
      %287 = arith.addf %282, %286 : vector<1x256xf32>
      %c52 = arith.constant 52 : index
      %288 = memref.load %arg2[%c52] : memref<98xf32, #tpu.memory_space<smem>>
      %c0_109 = arith.constant 0 : index
      %c3_110 = arith.constant 3 : index
      %289 = vector.load %arg8[%c0_109, %c3_110] : memref<1x358xf32, #tpu.memory_space<vmem>>, vector<1x256xf32>
      %290 = vector.broadcast %288 : f32 to vector<1x256xf32>
      %291 = arith.mulf %290, %289 : vector<1x256xf32>
      %292 = arith.addf %287, %291 : vector<1x256xf32>
      %c10 = arith.constant 10 : index
      %293 = memref.load %arg2[%c10] : memref<98xf32, #tpu.memory_space<smem>>
      %c0_111 = arith.constant 0 : index
      %c19 = arith.constant 19 : index
      %294 = vector.load %arg7[%c0_111, %c19] : memref<1x358xf32, #tpu.memory_space<vmem>>, vector<1x256xf32>
      %295 = vector.broadcast %293 : f32 to vector<1x256xf32>
      %296 = arith.mulf %295, %294 : vector<1x256xf32>
      %297 = arith.addf %292, %296 : vector<1x256xf32>
      %c59 = arith.constant 59 : index
      %298 = memref.load %arg2[%c59] : memref<98xf32, #tpu.memory_space<smem>>
      %c0_112 = arith.constant 0 : index
      %c19_113 = arith.constant 19 : index
      %299 = vector.load %arg8[%c0_112, %c19_113] : memref<1x358xf32, #tpu.memory_space<vmem>>, vector<1x256xf32>
      %300 = vector.broadcast %298 : f32 to vector<1x256xf32>
      %301 = arith.mulf %300, %299 : vector<1x256xf32>
      %302 = arith.addf %297, %301 : vector<1x256xf32>
      %c17_114 = arith.constant 17 : index
      %303 = memref.load %arg2[%c17_114] : memref<98xf32, #tpu.memory_space<smem>>
      %c0_115 = arith.constant 0 : index
      %c35_116 = arith.constant 35 : index
      %304 = vector.load %arg7[%c0_115, %c35_116] : memref<1x358xf32, #tpu.memory_space<vmem>>, vector<1x256xf32>
      %305 = vector.broadcast %303 : f32 to vector<1x256xf32>
      %306 = arith.mulf %305, %304 : vector<1x256xf32>
      %307 = arith.addf %302, %306 : vector<1x256xf32>
      %c66_117 = arith.constant 66 : index
      %308 = memref.load %arg2[%c66_117] : memref<98xf32, #tpu.memory_space<smem>>
      %c0_118 = arith.constant 0 : index
      %c35_119 = arith.constant 35 : index
      %309 = vector.load %arg8[%c0_118, %c35_119] : memref<1x358xf32, #tpu.memory_space<vmem>>, vector<1x256xf32>
      %310 = vector.broadcast %308 : f32 to vector<1x256xf32>
      %311 = arith.mulf %310, %309 : vector<1x256xf32>
      %312 = arith.addf %307, %311 : vector<1x256xf32>
      %c24 = arith.constant 24 : index
      %313 = memref.load %arg2[%c24] : memref<98xf32, #tpu.memory_space<smem>>
      %c0_120 = arith.constant 0 : index
      %c51_121 = arith.constant 51 : index
      %314 = vector.load %arg7[%c0_120, %c51_121] : memref<1x358xf32, #tpu.memory_space<vmem>>, vector<1x256xf32>
      %315 = vector.broadcast %313 : f32 to vector<1x256xf32>
      %316 = arith.mulf %315, %314 : vector<1x256xf32>
      %317 = arith.addf %312, %316 : vector<1x256xf32>
      %c73 = arith.constant 73 : index
      %318 = memref.load %arg2[%c73] : memref<98xf32, #tpu.memory_space<smem>>
      %c0_122 = arith.constant 0 : index
      %c51_123 = arith.constant 51 : index
      %319 = vector.load %arg8[%c0_122, %c51_123] : memref<1x358xf32, #tpu.memory_space<vmem>>, vector<1x256xf32>
      %320 = vector.broadcast %318 : f32 to vector<1x256xf32>
      %321 = arith.mulf %320, %319 : vector<1x256xf32>
      %322 = arith.addf %317, %321 : vector<1x256xf32>
      %c31 = arith.constant 31 : index
      %323 = memref.load %arg2[%c31] : memref<98xf32, #tpu.memory_space<smem>>
      %c0_124 = arith.constant 0 : index
      %c67 = arith.constant 67 : index
      %324 = vector.load %arg7[%c0_124, %c67] : memref<1x358xf32, #tpu.memory_space<vmem>>, vector<1x256xf32>
      %325 = vector.broadcast %323 : f32 to vector<1x256xf32>
      %326 = arith.mulf %325, %324 : vector<1x256xf32>
      %327 = arith.addf %322, %326 : vector<1x256xf32>
      %c80_125 = arith.constant 80 : index
      %328 = memref.load %arg2[%c80_125] : memref<98xf32, #tpu.memory_space<smem>>
      %c0_126 = arith.constant 0 : index
      %c67_127 = arith.constant 67 : index
      %329 = vector.load %arg8[%c0_126, %c67_127] : memref<1x358xf32, #tpu.memory_space<vmem>>, vector<1x256xf32>
      %330 = vector.broadcast %328 : f32 to vector<1x256xf32>
      %331 = arith.mulf %330, %329 : vector<1x256xf32>
      %332 = arith.addf %327, %331 : vector<1x256xf32>
      %c38 = arith.constant 38 : index
      %333 = memref.load %arg2[%c38] : memref<98xf32, #tpu.memory_space<smem>>
      %c0_128 = arith.constant 0 : index
      %c83 = arith.constant 83 : index
      %334 = vector.load %arg7[%c0_128, %c83] : memref<1x358xf32, #tpu.memory_space<vmem>>, vector<1x256xf32>
      %335 = vector.broadcast %333 : f32 to vector<1x256xf32>
      %336 = arith.mulf %335, %334 : vector<1x256xf32>
      %337 = arith.addf %332, %336 : vector<1x256xf32>
      %c87 = arith.constant 87 : index
      %338 = memref.load %arg2[%c87] : memref<98xf32, #tpu.memory_space<smem>>
      %c0_129 = arith.constant 0 : index
      %c83_130 = arith.constant 83 : index
      %339 = vector.load %arg8[%c0_129, %c83_130] : memref<1x358xf32, #tpu.memory_space<vmem>>, vector<1x256xf32>
      %340 = vector.broadcast %338 : f32 to vector<1x256xf32>
      %341 = arith.mulf %340, %339 : vector<1x256xf32>
      %342 = arith.addf %337, %341 : vector<1x256xf32>
      %c45 = arith.constant 45 : index
      %343 = memref.load %arg2[%c45] : memref<98xf32, #tpu.memory_space<smem>>
      %c0_131 = arith.constant 0 : index
      %c99 = arith.constant 99 : index
      %344 = vector.load %arg7[%c0_131, %c99] : memref<1x358xf32, #tpu.memory_space<vmem>>, vector<1x256xf32>
      %345 = vector.broadcast %343 : f32 to vector<1x256xf32>
      %346 = arith.mulf %345, %344 : vector<1x256xf32>
      %347 = arith.addf %342, %346 : vector<1x256xf32>
      %c94 = arith.constant 94 : index
      %348 = memref.load %arg2[%c94] : memref<98xf32, #tpu.memory_space<smem>>
      %c0_132 = arith.constant 0 : index
      %c99_133 = arith.constant 99 : index
      %349 = vector.load %arg8[%c0_132, %c99_133] : memref<1x358xf32, #tpu.memory_space<vmem>>, vector<1x256xf32>
      %350 = vector.broadcast %348 : f32 to vector<1x256xf32>
      %351 = arith.mulf %350, %349 : vector<1x256xf32>
      %352 = arith.addf %347, %351 : vector<1x256xf32>
      %c0_i32_134 = arith.constant 0 : i32
      %353 = vector.broadcast %c0_i32_134 : i32 to vector<1x256xi32>
      %354 = arith.addi %37, %353 : vector<1x256xi32>
      %c0_i32_135 = arith.constant 0 : i32
      %355 = vector.broadcast %c0_i32_135 : i32 to vector<1x256xi32>
      %356 = arith.cmpi sge, %354, %355 : vector<1x256xi32>
      %c16_i32_136 = arith.constant 16 : i32
      %357 = vector.broadcast %c16_i32_136 : i32 to vector<1x256xi32>
      %358 = arith.cmpi slt, %354, %357 : vector<1x256xi32>
      %359 = arith.andi %356, %358 : vector<1x256xi1>
      %cst_137 = arith.constant 0.000000e+00 : f32
      %360 = vector.broadcast %cst_137 : f32 to vector<1x256xf32>
      %361 = arith.select %359, %352, %360 : vector<1x256xi1>, vector<1x256xf32>
      %362 = arith.addf %281, %361 : vector<1x256xf32>
      %cst_138 = arith.constant 0.000000e+00 : f32
      %363 = vector.broadcast %cst_138 : f32 to vector<1x256xf32>
      %c4 = arith.constant 4 : index
      %364 = memref.load %arg2[%c4] : memref<98xf32, #tpu.memory_space<smem>>
      %c0_139 = arith.constant 0 : index
      %c4_140 = arith.constant 4 : index
      %365 = vector.load %arg7[%c0_139, %c4_140] : memref<1x358xf32, #tpu.memory_space<vmem>>, vector<1x256xf32>
      %366 = vector.broadcast %364 : f32 to vector<1x256xf32>
      %367 = arith.mulf %366, %365 : vector<1x256xf32>
      %368 = arith.addf %363, %367 : vector<1x256xf32>
      %c53 = arith.constant 53 : index
      %369 = memref.load %arg2[%c53] : memref<98xf32, #tpu.memory_space<smem>>
      %c0_141 = arith.constant 0 : index
      %c4_142 = arith.constant 4 : index
      %370 = vector.load %arg8[%c0_141, %c4_142] : memref<1x358xf32, #tpu.memory_space<vmem>>, vector<1x256xf32>
      %371 = vector.broadcast %369 : f32 to vector<1x256xf32>
      %372 = arith.mulf %371, %370 : vector<1x256xf32>
      %373 = arith.addf %368, %372 : vector<1x256xf32>
      %c11 = arith.constant 11 : index
      %374 = memref.load %arg2[%c11] : memref<98xf32, #tpu.memory_space<smem>>
      %c0_143 = arith.constant 0 : index
      %c20 = arith.constant 20 : index
      %375 = vector.load %arg7[%c0_143, %c20] : memref<1x358xf32, #tpu.memory_space<vmem>>, vector<1x256xf32>
      %376 = vector.broadcast %374 : f32 to vector<1x256xf32>
      %377 = arith.mulf %376, %375 : vector<1x256xf32>
      %378 = arith.addf %373, %377 : vector<1x256xf32>
      %c60 = arith.constant 60 : index
      %379 = memref.load %arg2[%c60] : memref<98xf32, #tpu.memory_space<smem>>
      %c0_144 = arith.constant 0 : index
      %c20_145 = arith.constant 20 : index
      %380 = vector.load %arg8[%c0_144, %c20_145] : memref<1x358xf32, #tpu.memory_space<vmem>>, vector<1x256xf32>
      %381 = vector.broadcast %379 : f32 to vector<1x256xf32>
      %382 = arith.mulf %381, %380 : vector<1x256xf32>
      %383 = arith.addf %378, %382 : vector<1x256xf32>
      %c18_146 = arith.constant 18 : index
      %384 = memref.load %arg2[%c18_146] : memref<98xf32, #tpu.memory_space<smem>>
      %c0_147 = arith.constant 0 : index
      %c36_148 = arith.constant 36 : index
      %385 = vector.load %arg7[%c0_147, %c36_148] : memref<1x358xf32, #tpu.memory_space<vmem>>, vector<1x256xf32>
      %386 = vector.broadcast %384 : f32 to vector<1x256xf32>
      %387 = arith.mulf %386, %385 : vector<1x256xf32>
      %388 = arith.addf %383, %387 : vector<1x256xf32>
      %c67_149 = arith.constant 67 : index
      %389 = memref.load %arg2[%c67_149] : memref<98xf32, #tpu.memory_space<smem>>
      %c0_150 = arith.constant 0 : index
      %c36_151 = arith.constant 36 : index
      %390 = vector.load %arg8[%c0_150, %c36_151] : memref<1x358xf32, #tpu.memory_space<vmem>>, vector<1x256xf32>
      %391 = vector.broadcast %389 : f32 to vector<1x256xf32>
      %392 = arith.mulf %391, %390 : vector<1x256xf32>
      %393 = arith.addf %388, %392 : vector<1x256xf32>
      %c25 = arith.constant 25 : index
      %394 = memref.load %arg2[%c25] : memref<98xf32, #tpu.memory_space<smem>>
      %c0_152 = arith.constant 0 : index
      %c52_153 = arith.constant 52 : index
      %395 = vector.load %arg7[%c0_152, %c52_153] : memref<1x358xf32, #tpu.memory_space<vmem>>, vector<1x256xf32>
      %396 = vector.broadcast %394 : f32 to vector<1x256xf32>
      %397 = arith.mulf %396, %395 : vector<1x256xf32>
      %398 = arith.addf %393, %397 : vector<1x256xf32>
      %c74 = arith.constant 74 : index
      %399 = memref.load %arg2[%c74] : memref<98xf32, #tpu.memory_space<smem>>
      %c0_154 = arith.constant 0 : index
      %c52_155 = arith.constant 52 : index
      %400 = vector.load %arg8[%c0_154, %c52_155] : memref<1x358xf32, #tpu.memory_space<vmem>>, vector<1x256xf32>
      %401 = vector.broadcast %399 : f32 to vector<1x256xf32>
      %402 = arith.mulf %401, %400 : vector<1x256xf32>
      %403 = arith.addf %398, %402 : vector<1x256xf32>
      %c32_156 = arith.constant 32 : index
      %404 = memref.load %arg2[%c32_156] : memref<98xf32, #tpu.memory_space<smem>>
      %c0_157 = arith.constant 0 : index
      %c68 = arith.constant 68 : index
      %405 = vector.load %arg7[%c0_157, %c68] : memref<1x358xf32, #tpu.memory_space<vmem>>, vector<1x256xf32>
      %406 = vector.broadcast %404 : f32 to vector<1x256xf32>
      %407 = arith.mulf %406, %405 : vector<1x256xf32>
      %408 = arith.addf %403, %407 : vector<1x256xf32>
      %c81_158 = arith.constant 81 : index
      %409 = memref.load %arg2[%c81_158] : memref<98xf32, #tpu.memory_space<smem>>
      %c0_159 = arith.constant 0 : index
      %c68_160 = arith.constant 68 : index
      %410 = vector.load %arg8[%c0_159, %c68_160] : memref<1x358xf32, #tpu.memory_space<vmem>>, vector<1x256xf32>
      %411 = vector.broadcast %409 : f32 to vector<1x256xf32>
      %412 = arith.mulf %411, %410 : vector<1x256xf32>
      %413 = arith.addf %408, %412 : vector<1x256xf32>
      %c39 = arith.constant 39 : index
      %414 = memref.load %arg2[%c39] : memref<98xf32, #tpu.memory_space<smem>>
      %c0_161 = arith.constant 0 : index
      %c84_162 = arith.constant 84 : index
      %415 = vector.load %arg7[%c0_161, %c84_162] : memref<1x358xf32, #tpu.memory_space<vmem>>, vector<1x256xf32>
      %416 = vector.broadcast %414 : f32 to vector<1x256xf32>
      %417 = arith.mulf %416, %415 : vector<1x256xf32>
      %418 = arith.addf %413, %417 : vector<1x256xf32>
      %c88 = arith.constant 88 : index
      %419 = memref.load %arg2[%c88] : memref<98xf32, #tpu.memory_space<smem>>
      %c0_163 = arith.constant 0 : index
      %c84_164 = arith.constant 84 : index
      %420 = vector.load %arg8[%c0_163, %c84_164] : memref<1x358xf32, #tpu.memory_space<vmem>>, vector<1x256xf32>
      %421 = vector.broadcast %419 : f32 to vector<1x256xf32>
      %422 = arith.mulf %421, %420 : vector<1x256xf32>
      %423 = arith.addf %418, %422 : vector<1x256xf32>
      %c46 = arith.constant 46 : index
      %424 = memref.load %arg2[%c46] : memref<98xf32, #tpu.memory_space<smem>>
      %c0_165 = arith.constant 0 : index
      %c100 = arith.constant 100 : index
      %425 = vector.load %arg7[%c0_165, %c100] : memref<1x358xf32, #tpu.memory_space<vmem>>, vector<1x256xf32>
      %426 = vector.broadcast %424 : f32 to vector<1x256xf32>
      %427 = arith.mulf %426, %425 : vector<1x256xf32>
      %428 = arith.addf %423, %427 : vector<1x256xf32>
      %c95 = arith.constant 95 : index
      %429 = memref.load %arg2[%c95] : memref<98xf32, #tpu.memory_space<smem>>
      %c0_166 = arith.constant 0 : index
      %c100_167 = arith.constant 100 : index
      %430 = vector.load %arg8[%c0_166, %c100_167] : memref<1x358xf32, #tpu.memory_space<vmem>>, vector<1x256xf32>
      %431 = vector.broadcast %429 : f32 to vector<1x256xf32>
      %432 = arith.mulf %431, %430 : vector<1x256xf32>
      %433 = arith.addf %428, %432 : vector<1x256xf32>
      %c1_i32_168 = arith.constant 1 : i32
      %434 = vector.broadcast %c1_i32_168 : i32 to vector<1x256xi32>
      %435 = arith.addi %37, %434 : vector<1x256xi32>
      %c0_i32_169 = arith.constant 0 : i32
      %436 = vector.broadcast %c0_i32_169 : i32 to vector<1x256xi32>
      %437 = arith.cmpi sge, %435, %436 : vector<1x256xi32>
      %c16_i32_170 = arith.constant 16 : i32
      %438 = vector.broadcast %c16_i32_170 : i32 to vector<1x256xi32>
      %439 = arith.cmpi slt, %435, %438 : vector<1x256xi32>
      %440 = arith.andi %437, %439 : vector<1x256xi1>
      %cst_171 = arith.constant 0.000000e+00 : f32
      %441 = vector.broadcast %cst_171 : f32 to vector<1x256xf32>
      %442 = arith.select %440, %433, %441 : vector<1x256xi1>, vector<1x256xf32>
      %443 = arith.addf %362, %442 : vector<1x256xf32>
      %cst_172 = arith.constant 0.000000e+00 : f32
      %444 = vector.broadcast %cst_172 : f32 to vector<1x256xf32>
      %c5 = arith.constant 5 : index
      %445 = memref.load %arg2[%c5] : memref<98xf32, #tpu.memory_space<smem>>
      %c0_173 = arith.constant 0 : index
      %c5_174 = arith.constant 5 : index
      %446 = vector.load %arg7[%c0_173, %c5_174] : memref<1x358xf32, #tpu.memory_space<vmem>>, vector<1x256xf32>
      %447 = vector.broadcast %445 : f32 to vector<1x256xf32>
      %448 = arith.mulf %447, %446 : vector<1x256xf32>
      %449 = arith.addf %444, %448 : vector<1x256xf32>
      %c54 = arith.constant 54 : index
      %450 = memref.load %arg2[%c54] : memref<98xf32, #tpu.memory_space<smem>>
      %c0_175 = arith.constant 0 : index
      %c5_176 = arith.constant 5 : index
      %451 = vector.load %arg8[%c0_175, %c5_176] : memref<1x358xf32, #tpu.memory_space<vmem>>, vector<1x256xf32>
      %452 = vector.broadcast %450 : f32 to vector<1x256xf32>
      %453 = arith.mulf %452, %451 : vector<1x256xf32>
      %454 = arith.addf %449, %453 : vector<1x256xf32>
      %c12 = arith.constant 12 : index
      %455 = memref.load %arg2[%c12] : memref<98xf32, #tpu.memory_space<smem>>
      %c0_177 = arith.constant 0 : index
      %c21_178 = arith.constant 21 : index
      %456 = vector.load %arg7[%c0_177, %c21_178] : memref<1x358xf32, #tpu.memory_space<vmem>>, vector<1x256xf32>
      %457 = vector.broadcast %455 : f32 to vector<1x256xf32>
      %458 = arith.mulf %457, %456 : vector<1x256xf32>
      %459 = arith.addf %454, %458 : vector<1x256xf32>
      %c61 = arith.constant 61 : index
      %460 = memref.load %arg2[%c61] : memref<98xf32, #tpu.memory_space<smem>>
      %c0_179 = arith.constant 0 : index
      %c21_180 = arith.constant 21 : index
      %461 = vector.load %arg8[%c0_179, %c21_180] : memref<1x358xf32, #tpu.memory_space<vmem>>, vector<1x256xf32>
      %462 = vector.broadcast %460 : f32 to vector<1x256xf32>
      %463 = arith.mulf %462, %461 : vector<1x256xf32>
      %464 = arith.addf %459, %463 : vector<1x256xf32>
      %c19_181 = arith.constant 19 : index
      %465 = memref.load %arg2[%c19_181] : memref<98xf32, #tpu.memory_space<smem>>
      %c0_182 = arith.constant 0 : index
      %c37_183 = arith.constant 37 : index
      %466 = vector.load %arg7[%c0_182, %c37_183] : memref<1x358xf32, #tpu.memory_space<vmem>>, vector<1x256xf32>
      %467 = vector.broadcast %465 : f32 to vector<1x256xf32>
      %468 = arith.mulf %467, %466 : vector<1x256xf32>
      %469 = arith.addf %464, %468 : vector<1x256xf32>
      %c68_184 = arith.constant 68 : index
      %470 = memref.load %arg2[%c68_184] : memref<98xf32, #tpu.memory_space<smem>>
      %c0_185 = arith.constant 0 : index
      %c37_186 = arith.constant 37 : index
      %471 = vector.load %arg8[%c0_185, %c37_186] : memref<1x358xf32, #tpu.memory_space<vmem>>, vector<1x256xf32>
      %472 = vector.broadcast %470 : f32 to vector<1x256xf32>
      %473 = arith.mulf %472, %471 : vector<1x256xf32>
      %474 = arith.addf %469, %473 : vector<1x256xf32>
      %c26 = arith.constant 26 : index
      %475 = memref.load %arg2[%c26] : memref<98xf32, #tpu.memory_space<smem>>
      %c0_187 = arith.constant 0 : index
      %c53_188 = arith.constant 53 : index
      %476 = vector.load %arg7[%c0_187, %c53_188] : memref<1x358xf32, #tpu.memory_space<vmem>>, vector<1x256xf32>
      %477 = vector.broadcast %475 : f32 to vector<1x256xf32>
      %478 = arith.mulf %477, %476 : vector<1x256xf32>
      %479 = arith.addf %474, %478 : vector<1x256xf32>
      %c75 = arith.constant 75 : index
      %480 = memref.load %arg2[%c75] : memref<98xf32, #tpu.memory_space<smem>>
      %c0_189 = arith.constant 0 : index
      %c53_190 = arith.constant 53 : index
      %481 = vector.load %arg8[%c0_189, %c53_190] : memref<1x358xf32, #tpu.memory_space<vmem>>, vector<1x256xf32>
      %482 = vector.broadcast %480 : f32 to vector<1x256xf32>
      %483 = arith.mulf %482, %481 : vector<1x256xf32>
      %484 = arith.addf %479, %483 : vector<1x256xf32>
      %c33_191 = arith.constant 33 : index
      %485 = memref.load %arg2[%c33_191] : memref<98xf32, #tpu.memory_space<smem>>
      %c0_192 = arith.constant 0 : index
      %c69 = arith.constant 69 : index
      %486 = vector.load %arg7[%c0_192, %c69] : memref<1x358xf32, #tpu.memory_space<vmem>>, vector<1x256xf32>
      %487 = vector.broadcast %485 : f32 to vector<1x256xf32>
      %488 = arith.mulf %487, %486 : vector<1x256xf32>
      %489 = arith.addf %484, %488 : vector<1x256xf32>
      %c82_193 = arith.constant 82 : index
      %490 = memref.load %arg2[%c82_193] : memref<98xf32, #tpu.memory_space<smem>>
      %c0_194 = arith.constant 0 : index
      %c69_195 = arith.constant 69 : index
      %491 = vector.load %arg8[%c0_194, %c69_195] : memref<1x358xf32, #tpu.memory_space<vmem>>, vector<1x256xf32>
      %492 = vector.broadcast %490 : f32 to vector<1x256xf32>
      %493 = arith.mulf %492, %491 : vector<1x256xf32>
      %494 = arith.addf %489, %493 : vector<1x256xf32>
      %c40 = arith.constant 40 : index
      %495 = memref.load %arg2[%c40] : memref<98xf32, #tpu.memory_space<smem>>
      %c0_196 = arith.constant 0 : index
      %c85_197 = arith.constant 85 : index
      %496 = vector.load %arg7[%c0_196, %c85_197] : memref<1x358xf32, #tpu.memory_space<vmem>>, vector<1x256xf32>
      %497 = vector.broadcast %495 : f32 to vector<1x256xf32>
      %498 = arith.mulf %497, %496 : vector<1x256xf32>
      %499 = arith.addf %494, %498 : vector<1x256xf32>
      %c89 = arith.constant 89 : index
      %500 = memref.load %arg2[%c89] : memref<98xf32, #tpu.memory_space<smem>>
      %c0_198 = arith.constant 0 : index
      %c85_199 = arith.constant 85 : index
      %501 = vector.load %arg8[%c0_198, %c85_199] : memref<1x358xf32, #tpu.memory_space<vmem>>, vector<1x256xf32>
      %502 = vector.broadcast %500 : f32 to vector<1x256xf32>
      %503 = arith.mulf %502, %501 : vector<1x256xf32>
      %504 = arith.addf %499, %503 : vector<1x256xf32>
      %c47 = arith.constant 47 : index
      %505 = memref.load %arg2[%c47] : memref<98xf32, #tpu.memory_space<smem>>
      %c0_200 = arith.constant 0 : index
      %c101 = arith.constant 101 : index
      %506 = vector.load %arg7[%c0_200, %c101] : memref<1x358xf32, #tpu.memory_space<vmem>>, vector<1x256xf32>
      %507 = vector.broadcast %505 : f32 to vector<1x256xf32>
      %508 = arith.mulf %507, %506 : vector<1x256xf32>
      %509 = arith.addf %504, %508 : vector<1x256xf32>
      %c96_201 = arith.constant 96 : index
      %510 = memref.load %arg2[%c96_201] : memref<98xf32, #tpu.memory_space<smem>>
      %c0_202 = arith.constant 0 : index
      %c101_203 = arith.constant 101 : index
      %511 = vector.load %arg8[%c0_202, %c101_203] : memref<1x358xf32, #tpu.memory_space<vmem>>, vector<1x256xf32>
      %512 = vector.broadcast %510 : f32 to vector<1x256xf32>
      %513 = arith.mulf %512, %511 : vector<1x256xf32>
      %514 = arith.addf %509, %513 : vector<1x256xf32>
      %c2_i32 = arith.constant 2 : i32
      %515 = vector.broadcast %c2_i32 : i32 to vector<1x256xi32>
      %516 = arith.addi %37, %515 : vector<1x256xi32>
      %c0_i32_204 = arith.constant 0 : i32
      %517 = vector.broadcast %c0_i32_204 : i32 to vector<1x256xi32>
      %518 = arith.cmpi sge, %516, %517 : vector<1x256xi32>
      %c16_i32_205 = arith.constant 16 : i32
      %519 = vector.broadcast %c16_i32_205 : i32 to vector<1x256xi32>
      %520 = arith.cmpi slt, %516, %519 : vector<1x256xi32>
      %521 = arith.andi %518, %520 : vector<1x256xi1>
      %cst_206 = arith.constant 0.000000e+00 : f32
      %522 = vector.broadcast %cst_206 : f32 to vector<1x256xf32>
      %523 = arith.select %521, %514, %522 : vector<1x256xi1>, vector<1x256xf32>
      %524 = arith.addf %443, %523 : vector<1x256xf32>
      %cst_207 = arith.constant 0.000000e+00 : f32
      %525 = vector.broadcast %cst_207 : f32 to vector<1x256xf32>
      %c6 = arith.constant 6 : index
      %526 = memref.load %arg2[%c6] : memref<98xf32, #tpu.memory_space<smem>>
      %c0_208 = arith.constant 0 : index
      %c6_209 = arith.constant 6 : index
      %527 = vector.load %arg7[%c0_208, %c6_209] : memref<1x358xf32, #tpu.memory_space<vmem>>, vector<1x256xf32>
      %528 = vector.broadcast %526 : f32 to vector<1x256xf32>
      %529 = arith.mulf %528, %527 : vector<1x256xf32>
      %530 = arith.addf %525, %529 : vector<1x256xf32>
      %c55 = arith.constant 55 : index
      %531 = memref.load %arg2[%c55] : memref<98xf32, #tpu.memory_space<smem>>
      %c0_210 = arith.constant 0 : index
      %c6_211 = arith.constant 6 : index
      %532 = vector.load %arg8[%c0_210, %c6_211] : memref<1x358xf32, #tpu.memory_space<vmem>>, vector<1x256xf32>
      %533 = vector.broadcast %531 : f32 to vector<1x256xf32>
      %534 = arith.mulf %533, %532 : vector<1x256xf32>
      %535 = arith.addf %530, %534 : vector<1x256xf32>
      %c13 = arith.constant 13 : index
      %536 = memref.load %arg2[%c13] : memref<98xf32, #tpu.memory_space<smem>>
      %c0_212 = arith.constant 0 : index
      %c22_213 = arith.constant 22 : index
      %537 = vector.load %arg7[%c0_212, %c22_213] : memref<1x358xf32, #tpu.memory_space<vmem>>, vector<1x256xf32>
      %538 = vector.broadcast %536 : f32 to vector<1x256xf32>
      %539 = arith.mulf %538, %537 : vector<1x256xf32>
      %540 = arith.addf %535, %539 : vector<1x256xf32>
      %c62 = arith.constant 62 : index
      %541 = memref.load %arg2[%c62] : memref<98xf32, #tpu.memory_space<smem>>
      %c0_214 = arith.constant 0 : index
      %c22_215 = arith.constant 22 : index
      %542 = vector.load %arg8[%c0_214, %c22_215] : memref<1x358xf32, #tpu.memory_space<vmem>>, vector<1x256xf32>
      %543 = vector.broadcast %541 : f32 to vector<1x256xf32>
      %544 = arith.mulf %543, %542 : vector<1x256xf32>
      %545 = arith.addf %540, %544 : vector<1x256xf32>
      %c20_216 = arith.constant 20 : index
      %546 = memref.load %arg2[%c20_216] : memref<98xf32, #tpu.memory_space<smem>>
      %c0_217 = arith.constant 0 : index
      %c38_218 = arith.constant 38 : index
      %547 = vector.load %arg7[%c0_217, %c38_218] : memref<1x358xf32, #tpu.memory_space<vmem>>, vector<1x256xf32>
      %548 = vector.broadcast %546 : f32 to vector<1x256xf32>
      %549 = arith.mulf %548, %547 : vector<1x256xf32>
      %550 = arith.addf %545, %549 : vector<1x256xf32>
      %c69_219 = arith.constant 69 : index
      %551 = memref.load %arg2[%c69_219] : memref<98xf32, #tpu.memory_space<smem>>
      %c0_220 = arith.constant 0 : index
      %c38_221 = arith.constant 38 : index
      %552 = vector.load %arg8[%c0_220, %c38_221] : memref<1x358xf32, #tpu.memory_space<vmem>>, vector<1x256xf32>
      %553 = vector.broadcast %551 : f32 to vector<1x256xf32>
      %554 = arith.mulf %553, %552 : vector<1x256xf32>
      %555 = arith.addf %550, %554 : vector<1x256xf32>
      %c27 = arith.constant 27 : index
      %556 = memref.load %arg2[%c27] : memref<98xf32, #tpu.memory_space<smem>>
      %c0_222 = arith.constant 0 : index
      %c54_223 = arith.constant 54 : index
      %557 = vector.load %arg7[%c0_222, %c54_223] : memref<1x358xf32, #tpu.memory_space<vmem>>, vector<1x256xf32>
      %558 = vector.broadcast %556 : f32 to vector<1x256xf32>
      %559 = arith.mulf %558, %557 : vector<1x256xf32>
      %560 = arith.addf %555, %559 : vector<1x256xf32>
      %c76 = arith.constant 76 : index
      %561 = memref.load %arg2[%c76] : memref<98xf32, #tpu.memory_space<smem>>
      %c0_224 = arith.constant 0 : index
      %c54_225 = arith.constant 54 : index
      %562 = vector.load %arg8[%c0_224, %c54_225] : memref<1x358xf32, #tpu.memory_space<vmem>>, vector<1x256xf32>
      %563 = vector.broadcast %561 : f32 to vector<1x256xf32>
      %564 = arith.mulf %563, %562 : vector<1x256xf32>
      %565 = arith.addf %560, %564 : vector<1x256xf32>
      %c34_226 = arith.constant 34 : index
      %566 = memref.load %arg2[%c34_226] : memref<98xf32, #tpu.memory_space<smem>>
      %c0_227 = arith.constant 0 : index
      %c70_228 = arith.constant 70 : index
      %567 = vector.load %arg7[%c0_227, %c70_228] : memref<1x358xf32, #tpu.memory_space<vmem>>, vector<1x256xf32>
      %568 = vector.broadcast %566 : f32 to vector<1x256xf32>
      %569 = arith.mulf %568, %567 : vector<1x256xf32>
      %570 = arith.addf %565, %569 : vector<1x256xf32>
      %c83_229 = arith.constant 83 : index
      %571 = memref.load %arg2[%c83_229] : memref<98xf32, #tpu.memory_space<smem>>
      %c0_230 = arith.constant 0 : index
      %c70_231 = arith.constant 70 : index
      %572 = vector.load %arg8[%c0_230, %c70_231] : memref<1x358xf32, #tpu.memory_space<vmem>>, vector<1x256xf32>
      %573 = vector.broadcast %571 : f32 to vector<1x256xf32>
      %574 = arith.mulf %573, %572 : vector<1x256xf32>
      %575 = arith.addf %570, %574 : vector<1x256xf32>
      %c41 = arith.constant 41 : index
      %576 = memref.load %arg2[%c41] : memref<98xf32, #tpu.memory_space<smem>>
      %c0_232 = arith.constant 0 : index
      %c86_233 = arith.constant 86 : index
      %577 = vector.load %arg7[%c0_232, %c86_233] : memref<1x358xf32, #tpu.memory_space<vmem>>, vector<1x256xf32>
      %578 = vector.broadcast %576 : f32 to vector<1x256xf32>
      %579 = arith.mulf %578, %577 : vector<1x256xf32>
      %580 = arith.addf %575, %579 : vector<1x256xf32>
      %c90 = arith.constant 90 : index
      %581 = memref.load %arg2[%c90] : memref<98xf32, #tpu.memory_space<smem>>
      %c0_234 = arith.constant 0 : index
      %c86_235 = arith.constant 86 : index
      %582 = vector.load %arg8[%c0_234, %c86_235] : memref<1x358xf32, #tpu.memory_space<vmem>>, vector<1x256xf32>
      %583 = vector.broadcast %581 : f32 to vector<1x256xf32>
      %584 = arith.mulf %583, %582 : vector<1x256xf32>
      %585 = arith.addf %580, %584 : vector<1x256xf32>
      %c48_236 = arith.constant 48 : index
      %586 = memref.load %arg2[%c48_236] : memref<98xf32, #tpu.memory_space<smem>>
      %c0_237 = arith.constant 0 : index
      %c102 = arith.constant 102 : index
      %587 = vector.load %arg7[%c0_237, %c102] : memref<1x358xf32, #tpu.memory_space<vmem>>, vector<1x256xf32>
      %588 = vector.broadcast %586 : f32 to vector<1x256xf32>
      %589 = arith.mulf %588, %587 : vector<1x256xf32>
      %590 = arith.addf %585, %589 : vector<1x256xf32>
      %c97_238 = arith.constant 97 : index
      %591 = memref.load %arg2[%c97_238] : memref<98xf32, #tpu.memory_space<smem>>
      %c0_239 = arith.constant 0 : index
      %c102_240 = arith.constant 102 : index
      %592 = vector.load %arg8[%c0_239, %c102_240] : memref<1x358xf32, #tpu.memory_space<vmem>>, vector<1x256xf32>
      %593 = vector.broadcast %591 : f32 to vector<1x256xf32>
      %594 = arith.mulf %593, %592 : vector<1x256xf32>
      %595 = arith.addf %590, %594 : vector<1x256xf32>
      %c3_i32 = arith.constant 3 : i32
      %596 = vector.broadcast %c3_i32 : i32 to vector<1x256xi32>
      %597 = arith.addi %37, %596 : vector<1x256xi32>
      %c0_i32_241 = arith.constant 0 : i32
      %598 = vector.broadcast %c0_i32_241 : i32 to vector<1x256xi32>
      %599 = arith.cmpi sge, %597, %598 : vector<1x256xi32>
      %c16_i32_242 = arith.constant 16 : i32
      %600 = vector.broadcast %c16_i32_242 : i32 to vector<1x256xi32>
      %601 = arith.cmpi slt, %597, %600 : vector<1x256xi32>
      %602 = arith.andi %599, %601 : vector<1x256xi1>
      %cst_243 = arith.constant 0.000000e+00 : f32
      %603 = vector.broadcast %cst_243 : f32 to vector<1x256xf32>
      %604 = arith.select %602, %595, %603 : vector<1x256xi1>, vector<1x256xf32>
      %605 = arith.addf %524, %604 : vector<1x256xf32>
      %606 = arith.negf %605 : vector<1x256xf32>
      %607 = math.exp %606 : vector<1x256xf32>
      %cst_244 = arith.constant 1.000000e+00 : f32
      %608 = vector.broadcast %cst_244 : f32 to vector<1x256xf32>
      %609 = arith.addf %608, %607 : vector<1x256xf32>
      %610 = arith.divf %608, %609 : vector<1x256xf32>
      %c0_245 = arith.constant 0 : index
      %c0_246 = arith.constant 0 : index
      %c0_247 = arith.constant 0 : index
      %611 = vector.load %arg4[%c0_245, %c0_246, %c0_247] : memref<1x1x256xf32, #tpu.memory_space<vmem>>, vector<1x1x256xf32>
      %612 = vector.shape_cast %611 : vector<1x1x256xf32> to vector<1x256xf32>
      %613 = vector.shape_cast %610 : vector<1x256xf32> to vector<1x1x256xf32>
      tpu.vector_store %arg4[%c0_245, %c0_246, %c0_247], %613 {strides = array<i32>} : memref<1x1x256xf32, #tpu.memory_space<vmem>>, vector<1x1x256xf32>,
    } else {
    }
    return
  }
  func.func @transform_0(%arg0: i32, %arg1: i32) -> i32 {
    %c0_i32 = arith.constant 0 : i32
    %c0_i32_0 = arith.constant 0 : i32
    return %c0_i32 : i32
  }
  func.func @transform_1(%arg0: i32, %arg1: i32) -> (i32, i32, i32) {
    %c0_i32 = arith.constant 0 : i32
    %c0_i32_0 = arith.constant 0 : i32
    return %arg0, %arg1, %c0_i32 : i32, i32, i32
  }
  func.func @transform_2(%arg0: i32, %arg1: i32) -> (i32, i32, i32) {
    %c0_i32 = arith.constant 0 : i32
    %c0_i32_0 = arith.constant 0 : i32
    %c0_i32_1 = arith.constant 0 : i32
    return %arg0, %c0_i32, %c0_i32_0 : i32, i32, i32
  }
}

</mosaic_0001>

<llo_original>
// kernel: tpu_custom_call.1
$region0: #{tpu_custom_call.1}
  #allocation0 [shape = 'u32[]', space=smem, size = 0x4, offset = 0x4, fixed_abs, tag = 'smem constant byte address 0x4 - core index']
  #allocation1 [shape = 'u32[144,128]{1,0:T(1,128)}', space=vmem, size = 0x12000, scoped, tag = 'internal scratch']
  #allocation2 [shape = 'f32[1,256]{1,0:T(1,128)}', space=vmem, size = 0x400, scoped, tag = 'scratch operand']
  #allocation3 [shape = 'f32[1,256]{1,0:T(1,128)}', space=vmem, size = 0x400, scoped, tag = 'scratch operand']
  #allocation4 [shape = 'f32[1,358]{1,0:T(1,128)}', space=vmem, size = 0x600, scoped, tag = 'scratch operand']
  #allocation5 [shape = 'f32[1,358]{1,0:T(1,128)}', space=vmem, size = 0x600, scoped, tag = 'scratch operand']
  %s0 = inlined_call_operand.hbm [shape: f32[98], index: 0, kind: input, shape index: {}]
  %s1 = inlined_call_operand.hbm [shape: f32[2,4,256], index: 1, kind: input, shape index: {}]
  %s2 = inlined_call_operand.hbm [shape: f32[2,1,256], index: 2, kind: output, shape index: {}]
  %s3 = sld [smem:[#allocation0]]
  $region61: #{tpu_custom_call.1} parent=0
    _
  %s5 = ssub.s32 1, %s3
  %s6 = scalar_select 0, %s5, %s3
  $region1: #{tpu_custom_call.1} parent=0
    #allocation6 [shape = 'u8[512]{0}', space=smem, size = 0x200, scoped, tag = 'input window, operand 0, single buffered']
    #allocation7 [shape = 's32[2]{0}', space=sflag, size = 0x8, scoped, tag = 'scoped memory for tpu_custom_call.1']
    #allocation8 [shape = 's32[2]{0}', space=sflag, size = 0x8, scoped, tag = 'scoped memory for tpu_custom_call.1']
    #allocation9 [shape = 's32[2]{0}', space=sflag, size = 0x8, scoped, tag = 'scoped memory for tpu_custom_call.1']
    #allocation10 [shape = 'u8[8192]{0}', space=vmem, size = 0x2000, scoped, tag = 'input window, operand 1']
    #allocation11 [shape = 'u8[2048]{0}', space=vmem, size = 0x800, scoped, tag = 'output window, operand 0']
    %7 = vsyncpa [#allocation9], 0
    %8 = vsyncpa [#allocation7], 0
    %s9 = scalar_lea.sflag [#allocation7], 1
    %10 = vsyncpa %s9, 0
    %11 = vsyncpa [#allocation8], 0
    %s12 = scalar_lea.sflag [#allocation8], 1
    %13 = vsyncpa %s12, 0
    loop: start=0, step=1, limit=4
    $region2: #{tpu_custom_call.1} parent=1 // loop_pre_header
      _
    $region3: #{tpu_custom_call.1} parent=1 // loop_header
      %s15 = sphi 0, %s19
      %p16 = scmp.ge.s32.totalorder %s15, 4
      %s22 = sphi 0, %s34
      %s23 = sphi 0, %s30
      %s24 = sphi 0, %s22
      %s25 = sphi 0, %s23
      %s26 = sphi 0, %s24
      %s27 = sphi 0, %s25
      %s35 = sphi 0, %s35
      %s37 = sphi 0, %s35
      %s38 = sphi 0, %s37
      %s52 = sphi 0, %s38
      %s60 = sphi 0, %s62
      %s63 = sphi 0, %s60
      %s64 = sphi 0, %s63
      %s80 = sphi 0, %s64
      %s86 = sphi 0, %s88
      %s89 = sphi 0, %s86
      %s90 = sphi 0, %s89
      %s106 = sphi 0, %s90
    $region4: #{tpu_custom_call.1} parent=1 // loop_header_branch
      %18 = sbr.rel (%p16) target = $region8
    $region5: #{tpu_custom_call.1} parent=1 // loop_body
      %s20 = ssub.s32 %s15, 1
      %s21 = ssub.s32 %s15, 2
      %s28 = sadd.s32 1, %s23
      %p29 = scmp.ge.s32.totalorder %s28, 1
      %s30 = scalar_select %p29, 0, %s28
      %s31 = sadd.s32 1, %s22
      %s32 = scalar_select %p29, %s31, %s22
      %p33 = scmp.ge.s32.totalorder %s32, 2
      %s34 = scalar_select %p33, 0, %s32
      %s36 = sadd.s32 %s35, 1
      %p39 = scmp.eq.s32.totalorder %s15, 1
      %p40 = scmp.ne.s32.totalorder %s35, %s37
      %p41 = scmp.eq.s32.totalorder %s15, 0
      %p42 = por %p40, %p41
      %p43 = scmp.ne.s32.totalorder %s35, %s37
      %p44 = scmp.eq.s32.totalorder %s20, 1
      %p45 = por %p43, %p44
      %p46 = scmp.ne.s32.totalorder %s37, %s38
      %p47 = scmp.eq.s32.totalorder %s20, 0
      %p48 = por %p46, %p47
      %p49 = scmp.ne.s32.totalorder %s37, %s38
      %p50 = scmp.eq.s32.totalorder %s21, 1
      %p51 = por %p49, %p50
      %p53 = scmp.ne.s32.totalorder %s38, %s52
      %p54 = scmp.eq.s32.totalorder %s21, 0
      %p55 = por %p53, %p54
      %s56 = ssub.s32 %s22, %s34
      %s57 = ssub.s32 %s23, %s30
      %s58 = sor.u32 %s56, %s57
      %p59 = scmp.eq.s32.totalorder %s58, 0
      %s61 = sadd.s32 %s60, 1
      %s62 = scalar_select %p59, %s60, %s61
      %p65 = pneg %p59
      %p66 = scmp.eq.s32.totalorder %s15, 1
      %p67 = por %p65, %p66
      %p68 = scmp.ne.s32.totalorder %s60, %s63
      %p69 = scmp.eq.s32.totalorder %s15, 0
      %p70 = por %p68, %p69
      %p71 = scmp.ne.s32.totalorder %s60, %s63
      %p72 = scmp.eq.s32.totalorder %s20, 1
      %p73 = por %p71, %p72
      %p74 = scmp.ne.s32.totalorder %s63, %s64
      %p75 = scmp.eq.s32.totalorder %s20, 0
      %p76 = por %p74, %p75
      %p77 = scmp.ne.s32.totalorder %s63, %s64
      %p78 = scmp.eq.s32.totalorder %s21, 1
      %p79 = por %p77, %p78
      %p81 = scmp.ne.s32.totalorder %s64, %s80
      %p82 = scmp.eq.s32.totalorder %s21, 0
      %p83 = por %p81, %p82
      %s84 = ssub.s32 %s22, %s34
      %p85 = scmp.eq.s32.totalorder %s84, 0
      %s87 = sadd.s32 %s86, 1
      %s88 = scalar_select %p85, %s86, %s87
      %p91 = pneg %p85
      %p92 = scmp.eq.s32.totalorder %s15, 1
      %p93 = por %p91, %p92
      %p94 = scmp.ne.s32.totalorder %s86, %s89
      %p95 = scmp.eq.s32.totalorder %s15, 0
      %p96 = por %p94, %p95
      %p97 = scmp.ne.s32.totalorder %s86, %s89
      %p98 = scmp.eq.s32.totalorder %s20, 1
      %p99 = por %p97, %p98
      %p100 = scmp.ne.s32.totalorder %s89, %s90
      %p101 = scmp.eq.s32.totalorder %s20, 0
      %p102 = por %p100, %p101
      %p103 = scmp.ne.s32.totalorder %s89, %s90
      %p104 = scmp.eq.s32.totalorder %s21, 1
      %p105 = por %p103, %p104
      %p107 = scmp.ne.s32.totalorder %s90, %s106
      %p108 = scmp.eq.s32.totalorder %s21, 0
      %p109 = por %p107, %p108
      %p110 = scmp.le.s32.totalorder 1, %s15
      %p111 = scmp.lt.s32.totalorder %s15, 3
      %p112 = pnand %p110, %p111
      %p113 = pneg %p112
      // Predicated region
      $region9: #{tpu_custom_call.1} parent=5 // pred_check
        _
      $region10: #{tpu_custom_call.1} parent=5 // pred_check_branch
        %115 = sbr.rel (%p112) target = $region12
      $region11: #{tpu_custom_call.1} parent=5 // pred_region
        %s116 = ssub.s32 %s15, 1
        // Predicated region
        $region13: #{tpu_custom_call.1} parent=11 // pred_check
          %p117 = pneg %p48
        $region14: #{tpu_custom_call.1} parent=11 // pred_check_branch
          %119 = sbr.rel (%p117) target = $region16
        $region15: #{tpu_custom_call.1} parent=11 // pred_region
          %s121 = ssub.s32 16, 16
          %122 = vsyncadd [#allocation9], %s121
          %125 = dma.hbm_to_smem %s0, 16, [#allocation6], [#allocation9]
        $region16: #{tpu_custom_call.1} parent=11 // pred_fallthru
          _
      $region12: #{tpu_custom_call.1} parent=5 // pred_fallthru
        _
      %p126 = scmp.lt.s32.totalorder %s15, 2
      // Predicated region
      $region17: #{tpu_custom_call.1} parent=5 // pred_check
        %p127 = pneg %p126
      $region18: #{tpu_custom_call.1} parent=5 // pred_check_branch
        %129 = sbr.rel (%p127) target = $region20
      $region19: #{tpu_custom_call.1} parent=5 // pred_region
        // Predicated region
        $region21: #{tpu_custom_call.1} parent=19 // pred_check
          %p130 = pneg %p70
        $region22: #{tpu_custom_call.1} parent=19 // pred_check_branch
          %132 = sbr.rel (%p130) target = $region24
        $region23: #{tpu_custom_call.1} parent=19 // pred_region
          %s133 = sand.u32 %s60, 1
          %s134 = scalar_lea.sflag [#allocation7], %s133
          %s135 = sand.u32 %s60, 1
          %s136 = smul.addr %s135, 8
          %s137 = scalar_lea.vmem [#allocation10], %s136
          %s139 = ssub.s32 128, 128
          %140 = vsyncadd %s134, %s139
          %s141 = smul.addr %s23, 2
          %s142 = smul.addr %s22, 2
          %s143 = sadd.s32 %s141, %s142
          %s144 = smul.addr %s143, 64
          %s145 = scalar_lea.hbm %s1, %s144
          %s147 = sshll.u32 %s137, 4
          %s148 = int_to_ptr.vmem [resolvable:$true] %s147
          %150 = dma.hbm_to_vmem [thread:$0]  %s145, 128, %s148, %s134
        $region24: #{tpu_custom_call.1} parent=19 // pred_fallthru
          _
      $region20: #{tpu_custom_call.1} parent=5 // pred_fallthru
        _
      %p151 = scmp.le.s32.totalorder 1, %s15
      %p152 = scmp.lt.s32.totalorder %s15, 3
      %p153 = pnand %p151, %p152
      %p154 = pneg %p153
      // Predicated region
      $region25: #{tpu_custom_call.1} parent=5 // pred_check
        _
      $region26: #{tpu_custom_call.1} parent=5 // pred_check_branch
        %156 = sbr.rel (%p153) target = $region28
      $region27: #{tpu_custom_call.1} parent=5 // pred_region
        %s157 = ssub.s32 %s15, 1
        // Predicated region
        $region29: #{tpu_custom_call.1} parent=27 // pred_check
          %p158 = pneg %p48
        $region30: #{tpu_custom_call.1} parent=27 // pred_check_branch
          %160 = sbr.rel (%p158) target = $region32
        $region31: #{tpu_custom_call.1} parent=27 // pred_region
          %161 = dma.done [#allocation9], 16
        $region32: #{tpu_custom_call.1} parent=27 // pred_fallthru
          _
        %s162 = sand.u32 %s63, 1
        %s163 = scalar_lea.sflag [#allocation7], %s162
        %s164 = sand.u32 %s63, 1
        %s165 = smul.addr %s164, 8
        %s166 = scalar_lea.vmem [#allocation10], %s165
        // Predicated region
        $region33: #{tpu_custom_call.1} parent=27 // pred_check
          %p167 = pneg %p76
        $region34: #{tpu_custom_call.1} parent=27 // pred_check_branch
          %169 = sbr.rel (%p167) target = $region36
        $region35: #{tpu_custom_call.1} parent=27 // pred_region
          %170 = dma.done %s163, 128
        $region36: #{tpu_custom_call.1} parent=27 // pred_fallthru
          _
        %171 = sfence
        %p172 = pneg %p48
        %p173 = pneg %p45
        %s174 = sand.u32 %s63, 1
        %s175 = scalar_lea.sflag [#allocation7], %s174
        %s176 = sand.u32 %s63, 1
        %s177 = smul.addr %s176, 8
        %s178 = scalar_lea.vmem [#allocation10], %s177
        %p179 = pneg %p76
        %p180 = pneg %p73
        %p181 = pneg %p102
        %p182 = pneg %p99
        %s183 = sand.u32 %s89, 1
        %s184 = scalar_lea.sflag [#allocation8], %s183
        %s185 = sand.u32 %s89, 1
        %s186 = smul.addr %s185, 2
        %s187 = scalar_lea.vmem [#allocation11], %s186
        %v188 = vld [vmem:[%s166] sm:$0xff]
        %v190 = vcombine.high %v188, %v188
        %vm192 = vcmask 1043456
        %v193 = vsel %vm192, %v188, 0.0
        %v194 = vrot.slane %v193, 4
        %v195 = vadd.f32 %v193, %v194
        %v196 = vrot.slane %v195, 2
        %v197 = vadd.f32 %v195, %v196
        %v198 = vrot.slane %v197, 1
        %v199 = vadd.f32 %v197, %v198
        %v200 = vsel %vm192, %v190, 0.0
        %v201 = vrot.slane %v200, 4
        %v202 = vadd.f32 %v200, %v201
        %v203 = vrot.slane %v202, 2
        %v204 = vadd.f32 %v202, %v203
        %v205 = vrot.slane %v204, 1
        %v206 = vadd.f32 %v204, %v205
        %v207 = vsel %vm192, %v188, -inf
        %v208 = vrot.slane %v207, 4
        %v209 = vmax.f32 %v207, %v208
        %v210 = vrot.slane %v209, 2
        %v211 = vmax.f32 %v209, %v210
        %v212 = vrot.slane %v211, 1
        %v213 = vmax.f32 %v211, %v212
        %v214 = vsel %vm192, %v190, -inf
        %v215 = vrot.slane %v214, 4
        %v216 = vmax.f32 %v214, %v215
        %v217 = vrot.slane %v216, 2
        %v218 = vmax.f32 %v216, %v217
        %v219 = vrot.slane %v218, 1
        %v220 = vmax.f32 %v218, %v219
        %p221 = scmp.eq.s32.totalorder %s25, 0
        // Predicated region
        $region37: #{tpu_custom_call.1} parent=27 // pred_check
          %p222 = pneg %p221
        $region38: #{tpu_custom_call.1} parent=27 // pred_check_branch
          %224 = sbr.rel (%p222) target = $region40
        $region39: #{tpu_custom_call.1} parent=27 // pred_region
          %v227 = vcombine.low %v199, %v206
          %v229 = vunpack.c.l.s4 1966171168
          %v230 = vunpack.c.0.s8 %v229
          %v231 = vlaneseq
          %v232 = vshrl.u32 %v231, 7
          %v233 = vsub.s32 %v230, %v232
          %v234 = vrot.slane %v227, %v233
          %v236 = vunpack.c.l.s4 1966171168
          %v237 = vunpack.c.0.s8 %v236
          %v238 = vlaneseq
          %v239 = vshrl.u32 %v238, 7
          %v240 = vsub.s32 %v237, %v239
          %v241 = vrot.slane %v234, %v240
          %v243 = vlaneseq
          %vm244 = vcmp.ge.s32.totalorder %v243, 0
          %vm245 = vcmp.lt.s32.totalorder %v243, 256
          %vm246 = vmand %vm244, %vm245
          %247 = vst.msk [vmem:[#allocation2] sm:$0x3] %vm246, %v241
          %v250 = vcombine.low %v213, %v220
          %v252 = vunpack.c.l.s4 1966171168
          %v253 = vunpack.c.0.s8 %v252
          %v254 = vlaneseq
          %v255 = vshrl.u32 %v254, 7
          %v256 = vsub.s32 %v253, %v255
          %v257 = vrot.slane %v250, %v256
          %v259 = vunpack.c.l.s4 1966171168
          %v260 = vunpack.c.0.s8 %v259
          %v261 = vlaneseq
          %v262 = vshrl.u32 %v261, 7
          %v263 = vsub.s32 %v260, %v262
          %v264 = vrot.slane %v257, %v263
          %266 = vst.msk [vmem:[#allocation3] sm:$0x3] %vm246, %v264
          %vm267 = vcmp.lt.s32.totalorder %v243, 358
          %vm268 = vmand %vm244, %vm267
          %269 = vst.msk [vmem:[#allocation4] sm:$0x7] %vm268, 0.0
          %270 = vst.msk [vmem:[#allocation5] sm:$0x7] %vm268, 0.0
        $region40: #{tpu_custom_call.1} parent=27 // pred_fallthru
          _
        %p271 = scmp.gt.s32.totalorder %s25, 0
        // Predicated region
        $region41: #{tpu_custom_call.1} parent=27 // pred_check
          %p272 = pneg %p271
        $region42: #{tpu_custom_call.1} parent=27 // pred_check_branch
          %274 = sbr.rel (%p272) target = $region44
        $region43: #{tpu_custom_call.1} parent=27 // pred_region
          %v275 = vld [vmem:[#allocation2] sm:$0x3]
          %v278 = vcombine.low %v199, %v206
          %v280 = vunpack.c.l.s4 1966171168
          %v281 = vunpack.c.0.s8 %v280
          %v282 = vlaneseq
          %v283 = vshrl.u32 %v282, 7
          %v284 = vsub.s32 %v281, %v283
          %v285 = vrot.slane %v278, %v284
          %v287 = vunpack.c.l.s4 1966171168
          %v288 = vunpack.c.0.s8 %v287
          %v289 = vlaneseq
          %v290 = vshrl.u32 %v289, 7
          %v291 = vsub.s32 %v288, %v290
          %v292 = vrot.slane %v285, %v291
          %v294 = vadd.f32 %v275, %v292
          %v295 = vlaneseq
          %vm296 = vcmp.ge.s32.totalorder %v295, 0
          %vm297 = vcmp.lt.s32.totalorder %v295, 256
          %vm298 = vmand %vm296, %vm297
          %299 = vst.msk [vmem:[#allocation2] sm:$0x3] %vm298, %v294
          %v300 = vld [vmem:[#allocation3] sm:$0x3]
          %v303 = vcombine.low %v213, %v220
          %v305 = vunpack.c.l.s4 1966171168
          %v306 = vunpack.c.0.s8 %v305
          %v307 = vlaneseq
          %v308 = vshrl.u32 %v307, 7
          %v309 = vsub.s32 %v306, %v308
          %v310 = vrot.slane %v303, %v309
          %v312 = vunpack.c.l.s4 1966171168
          %v313 = vunpack.c.0.s8 %v312
          %v314 = vlaneseq
          %v315 = vshrl.u32 %v314, 7
          %v316 = vsub.s32 %v313, %v315
          %v317 = vrot.slane %v310, %v316
          %v319 = vmax.f32 %v300, %v317
          %320 = vst.msk [vmem:[#allocation3] sm:$0x3] %vm298, %v319
        $region44: #{tpu_custom_call.1} parent=27 // pred_fallthru
          _
        // Predicated region
        $region45: #{tpu_custom_call.1} parent=27 // pred_check
          %p321 = pneg %p221
        $region46: #{tpu_custom_call.1} parent=27 // pred_check_branch
          %323 = sbr.rel (%p321) target = $region48
        $region47: #{tpu_custom_call.1} parent=27 // pred_region
          %v324 = vld [vmem:[#allocation2] sm:$0x3]
          %v325 = vmul.f32 %v324, 0.25
          %327 = vrot.lane.b32.xlu0 %v325, 51
          %v328 = vpop.permute.xlu0 %327
          %v329 = vrot.slane %v328, 7
          %vm330 = vcmask 416768
          %v331 = vsel %vm330, %v329, %v328
          %v333 = vlaneseq
          %vm334 = vcmp.ge.s32.totalorder %v333, 51
          %vm335 = vcmp.lt.s32.totalorder %v333, 307
          %vm336 = vmand %vm334, %vm335
          %337 = vst.msk [vmem:[#allocation4] sm:$0x7] %vm336, %v331
          %v338 = vld [vmem:[#allocation3] sm:$0x3]
          %340 = vrot.lane.b32.xlu0 %v338, 51
          %v341 = vpop.permute.xlu0 %340
          %v342 = vrot.slane %v341, 7
          %v343 = vsel %vm330, %v342, %v341
          %345 = vst.msk [vmem:[#allocation5] sm:$0x7] %vm336, %v343
          %v346 = vlaneseq
          %v347 = vand.u32 %v346, 127
          %v348 = vadd.s32 %v347, 128
          %vm349 = vcmp.lt.s32.totalorder %v347, 0
          %v350 = vsub.s32 0, %v347
          %v351 = vsel %vm349, %v350, %v347
          %v352 = vshrl.u32 %v351, 4
          %v353 = vand.u32 %v351, 15
          %v354 = vsub.s32 0, %v353
          %v355 = vsel %vm349, %v354, %v353
          %vm356 = vcmp.lt.s32.totalorder %v348, 0
          %v357 = vsub.s32 0, %v348
          %v358 = vsel %vm356, %v357, %v348
          %v359 = vshrl.u32 %v358, 4
          %v360 = vand.u32 %v358, 15
          %v361 = vsub.s32 0, %v360
          %v362 = vsel %vm356, %v361, %v360
          %vm363 = vcmp.ne.s32.totalorder %v355, 0
          %vm364 = vcmp.ne.s32.totalorder %v362, 0
          %vm365 = vcmp.lt.s32.totalorder %v355, 0
          %vm366 = vcmp.lt.s32.totalorder %v362, 0
          %vm367 = vmand %vm365, %vm363
          %vm368 = vmand %vm366, %vm364
          %v369 = vadd.s32 %v355, 16
          %v370 = vadd.s32 %v362, 16
          %v371 = vsel %vm367, %v369, %v355
          %v372 = vsel %vm368, %v370, %v362
          %s373 = sld [smem:[#allocation6]]
          %v374 = vld [vmem:[#allocation4] sm:$0x3]
          %v375 = vstv %s373
          %v376 = vmul.f32 %v375, %v374
          %v377 = vadd.f32 %v376, 0.0
          %s378 = sld [smem:[#allocation6 + $0x31]]
          %v379 = vld [vmem:[#allocation5] sm:$0x3]
          %v380 = vstv %s378
          %v381 = vmul.f32 %v380, %v379
          %v382 = vadd.f32 %v377, %v381
          %s383 = sld [smem:[#allocation6 + $0x7]]
          %v384 = vld [vmem:[#allocation4] sm:$0x7]
          %v385 = vstv %s383
          %v386 = vmul.f32 %v385, %v384
          %388 = vrot.lane.b32.xlu0 %v386, 112
          %v389 = vpop.permute.xlu0 %388
          %v390 = vrot.slane %v389, 1
          %vm391 = vcmask 916480
          %v392 = vsel %vm391, %v389, %v390
          %v394 = vadd.f32 %v382, %v392
          %s395 = sld [smem:[#allocation6 + $0x38]]
          %v396 = vld [vmem:[#allocation5] sm:$0x7]
          %v397 = vstv %s395
          %v398 = vmul.f32 %v397, %v396
          %400 = vrot.lane.b32.xlu0 %v398, 112
          %v401 = vpop.permute.xlu0 %400
          %v402 = vrot.slane %v401, 1
          %v403 = vsel %vm391, %v401, %v402
          %v405 = vadd.f32 %v394, %v403
          %s406 = sld [smem:[#allocation6 + $0xe]]
          %v407 = vstv %s406
          %v408 = vmul.f32 %v407, %v384
          %410 = vrot.lane.b32.xlu0 %v408, 96
          %v411 = vpop.permute.xlu0 %410
          %v412 = vrot.slane %v411, 1
          %vm413 = vcmask 785408
          %v414 = vsel %vm413, %v411, %v412
          %v416 = vadd.f32 %v405, %v414
          %s417 = sld [smem:[#allocation6 + $0x3f]]
          %v418 = vstv %s417
          %v419 = vmul.f32 %v418, %v396
          %421 = vrot.lane.b32.xlu0 %v419, 96
          %v422 = vpop.permute.xlu0 %421
          %v423 = vrot.slane %v422, 1
          %v424 = vsel %vm413, %v422, %v423
          %v426 = vadd.f32 %v416, %v424
          %s427 = sld [smem:[#allocation6 + $0x15]]
          %v428 = vstv %s427
          %v429 = vmul.f32 %v428, %v384
          %431 = vrot.lane.b32.xlu0 %v429, 80
          %v432 = vpop.permute.xlu0 %431
          %v433 = vrot.slane %v432, 1
          %vm434 = vcmask 654336
          %v435 = vsel %vm434, %v432, %v433
          %v437 = vadd.f32 %v426, %v435
          %s438 = sld [smem:[#allocation6 + $0x46]]
          %v439 = vstv %s438
          %v440 = vmul.f32 %v439, %v396
          %442 = vrot.lane.b32.xlu0 %v440, 80
          %v443 = vpop.permute.xlu0 %442
          %v444 = vrot.slane %v443, 1
          %v445 = vsel %vm434, %v443, %v444
          %v447 = vadd.f32 %v437, %v445
          %s448 = sld [smem:[#allocation6 + $0x1c]]
          %v449 = vstv %s448
          %v450 = vmul.f32 %v449, %v384
          %452 = vrot.lane.b32.xlu0 %v450, 64
          %v453 = vpop.permute.xlu0 %452
          %v454 = vrot.slane %v453, 1
          %vm455 = vcmask 523264
          %v456 = vsel %vm455, %v453, %v454
          %v458 = vadd.f32 %v447, %v456
          %s459 = sld [smem:[#allocation6 + $0x4d]]
          %v460 = vstv %s459
          %v461 = vmul.f32 %v460, %v396
          %463 = vrot.lane.b32.xlu0 %v461, 64
          %v464 = vpop.permute.xlu0 %463
          %v465 = vrot.slane %v464, 1
          %v466 = vsel %vm455, %v464, %v465
          %v468 = vadd.f32 %v458, %v466
          %s469 = sld [smem:[#allocation6 + $0x23]]
          %v470 = vstv %s469
          %v471 = vmul.f32 %v470, %v384
          %473 = vrot.lane.b32.xlu0 %v471, 48
          %v474 = vpop.permute.xlu0 %473
          %v475 = vrot.slane %v474, 1
          %vm476 = vcmask 392192
          %v477 = vsel %vm476, %v474, %v475
          %v479 = vadd.f32 %v468, %v477
          %s480 = sld [smem:[#allocation6 + $0x54]]
          %v481 = vstv %s480
          %v482 = vmul.f32 %v481, %v396
          %484 = vrot.lane.b32.xlu0 %v482, 48
          %v485 = vpop.permute.xlu0 %484
          %v486 = vrot.slane %v485, 1
          %v487 = vsel %vm476, %v485, %v486
          %v489 = vadd.f32 %v479, %v487
          %s490 = sld [smem:[#allocation6 + $0x2a]]
          %v491 = vstv %s490
          %v492 = vmul.f32 %v491, %v384
          %494 = vrot.lane.b32.xlu0 %v492, 32
          %v495 = vpop.permute.xlu0 %494
          %v496 = vrot.slane %v495, 1
          %vm497 = vcmask 261120
          %v498 = vsel %vm497, %v495, %v496
          %v500 = vadd.f32 %v489, %v498
          %s501 = sld [smem:[#allocation6 + $0x5b]]
          %v502 = vstv %s501
          %v503 = vmul.f32 %v502, %v396
          %505 = vrot.lane.b32.xlu0 %v503, 32
          %v506 = vpop.permute.xlu0 %505
          %v507 = vrot.slane %v506, 1
          %v508 = vsel %vm497, %v506, %v507
          %v510 = vadd.f32 %v500, %v508
          %v511 = vadd.s32 %v371, 4294967293
          %v512 = vadd.s32 %v372, 4294967293
          %vm513 = vcmp.ge.s32.totalorder %v511, 0
          %vm514 = vcmp.ge.s32.totalorder %v512, 0
          %vm515 = vcmp.lt.s32.totalorder %v511, 16
          %vm516 = vcmp.lt.s32.totalorder %v512, 16
          %vm517 = vmand %vm513, %vm515
          %vm518 = vmand %vm514, %vm516
          %v520 = vlaneseq
          %v521 = vshrl.u32 %v520, 7
          %v522 = vsub.s32 0, %v521
          %v523 = vrot.slane %v510, %v522
          %v524 = vlaneseq
          %v525 = vshrl.u32 %v524, 7
          %v526 = vsub.s32 1, %v525
          %v527 = vrot.slane %v510, %v526
          %v530 = vsel %vm517, %v523, 0.0
          %v531 = vsel %vm518, %v527, 0.0
          %v532 = vadd.f32 %v530, 0.0
          %v533 = vadd.f32 %v531, 0.0
          %s534 = sld [smem:[#allocation6 + $0x1]]
          %v535 = vstv %s534
          %v536 = vmul.f32 %v535, %v384
          %v537 = vadd.f32 %v536, 0.0
          %s538 = sld [smem:[#allocation6 + $0x32]]
          %v539 = vstv %s538
          %v540 = vmul.f32 %v539, %v396
          %v541 = vadd.f32 %v537, %v540
          %s542 = sld [smem:[#allocation6 + $0x8]]
          %v543 = vstv %s542
          %v544 = vmul.f32 %v543, %v384
          %546 = vrot.lane.b32.xlu0 %v544, 112
          %v547 = vpop.permute.xlu0 %546
          %v548 = vrot.slane %v547, 1
          %v549 = vsel %vm391, %v547, %v548
          %v551 = vadd.f32 %v541, %v549
          %s552 = sld [smem:[#allocation6 + $0x39]]
          %v553 = vstv %s552
          %v554 = vmul.f32 %v553, %v396
          %556 = vrot.lane.b32.xlu0 %v554, 112
          %v557 = vpop.permute.xlu0 %556
          %v558 = vrot.slane %v557, 1
          %v559 = vsel %vm391, %v557, %v558
          %v561 = vadd.f32 %v551, %v559
          %s562 = sld [smem:[#allocation6 + $0xf]]
          %v563 = vstv %s562
          %v564 = vmul.f32 %v563, %v384
          %566 = vrot.lane.b32.xlu0 %v564, 96
          %v567 = vpop.permute.xlu0 %566
          %v568 = vrot.slane %v567, 1
          %v569 = vsel %vm413, %v567, %v568
          %v571 = vadd.f32 %v561, %v569
          %s572 = sld [smem:[#allocation6 + $0x40]]
          %v573 = vstv %s572
          %v574 = vmul.f32 %v573, %v396
          %576 = vrot.lane.b32.xlu0 %v574, 96
          %v577 = vpop.permute.xlu0 %576
          %v578 = vrot.slane %v577, 1
          %v579 = vsel %vm413, %v577, %v578
          %v581 = vadd.f32 %v571, %v579
          %s582 = sld [smem:[#allocation6 + $0x16]]
          %v583 = vstv %s582
          %v584 = vmul.f32 %v583, %v384
          %586 = vrot.lane.b32.xlu0 %v584, 80
          %v587 = vpop.permute.xlu0 %586
          %v588 = vrot.slane %v587, 1
          %v589 = vsel %vm434, %v587, %v588
          %v591 = vadd.f32 %v581, %v589
          %s592 = sld [smem:[#allocation6 + $0x47]]
          %v593 = vstv %s592
          %v594 = vmul.f32 %v593, %v396
          %596 = vrot.lane.b32.xlu0 %v594, 80
          %v597 = vpop.permute.xlu0 %596
          %v598 = vrot.slane %v597, 1
          %v599 = vsel %vm434, %v597, %v598
          %v601 = vadd.f32 %v591, %v599
          %s602 = sld [smem:[#allocation6 + $0x1d]]
          %v603 = vstv %s602
          %v604 = vmul.f32 %v603, %v384
          %606 = vrot.lane.b32.xlu0 %v604, 64
          %v607 = vpop.permute.xlu0 %606
          %v608 = vrot.slane %v607, 1
          %v609 = vsel %vm455, %v607, %v608
          %v611 = vadd.f32 %v601, %v609
          %s612 = sld [smem:[#allocation6 + $0x4e]]
          %v613 = vstv %s612
          %v614 = vmul.f32 %v613, %v396
          %616 = vrot.lane.b32.xlu0 %v614, 64
          %v617 = vpop.permute.xlu0 %616
          %v618 = vrot.slane %v617, 1
          %v619 = vsel %vm455, %v617, %v618
          %v621 = vadd.f32 %v611, %v619
          %s622 = sld [smem:[#allocation6 + $0x24]]
          %v623 = vstv %s622
          %v624 = vmul.f32 %v623, %v384
          %626 = vrot.lane.b32.xlu0 %v624, 48
          %v627 = vpop.permute.xlu0 %626
          %v628 = vrot.slane %v627, 1
          %v629 = vsel %vm476, %v627, %v628
          %v631 = vadd.f32 %v621, %v629
          %s632 = sld [smem:[#allocation6 + $0x55]]
          %v633 = vstv %s632
          %v634 = vmul.f32 %v633, %v396
          %636 = vrot.lane.b32.xlu0 %v634, 48
          %v637 = vpop.permute.xlu0 %636
          %v638 = vrot.slane %v637, 1
          %v639 = vsel %vm476, %v637, %v638
          %v641 = vadd.f32 %v631, %v639
          %s642 = sld [smem:[#allocation6 + $0x2b]]
          %v643 = vstv %s642
          %v644 = vmul.f32 %v643, %v384
          %646 = vrot.lane.b32.xlu0 %v644, 32
          %v647 = vpop.permute.xlu0 %646
          %v648 = vrot.slane %v647, 1
          %v649 = vsel %vm497, %v647, %v648
          %v651 = vadd.f32 %v641, %v649
          %s652 = sld [smem:[#allocation6 + $0x5c]]
          %v653 = vstv %s652
          %v654 = vmul.f32 %v653, %v396
          %656 = vrot.lane.b32.xlu0 %v654, 32
          %v657 = vpop.permute.xlu0 %656
          %v658 = vrot.slane %v657, 1
          %v659 = vsel %vm497, %v657, %v658
          %v661 = vadd.f32 %v651, %v659
          %v662 = vadd.s32 %v371, 4294967294
          %v663 = vadd.s32 %v372, 4294967294
          %vm664 = vcmp.ge.s32.totalorder %v662, 0
          %vm665 = vcmp.ge.s32.totalorder %v663, 0
          %vm666 = vcmp.lt.s32.totalorder %v662, 16
          %vm667 = vcmp.lt.s32.totalorder %v663, 16
          %vm668 = vmand %vm664, %vm666
          %vm669 = vmand %vm665, %vm667
          %v671 = vlaneseq
          %v672 = vshrl.u32 %v671, 7
          %v673 = vsub.s32 0, %v672
          %v674 = vrot.slane %v661, %v673
          %v675 = vlaneseq
          %v676 = vshrl.u32 %v675, 7
          %v677 = vsub.s32 1, %v676
          %v678 = vrot.slane %v661, %v677
          %v679 = vlaneseq
          %v680 = vshrl.u32 %v679, 7
          %v681 = vsub.s32 2, %v680
          %v682 = vrot.slane %v661, %v681
          %683 = vrot.lane.b32.xlu0 %v674, 127
          %v684 = vpop.permute.xlu0 %683
          %685 = vrot.lane.b32.xlu0 %v678, 127
          %v686 = vpop.permute.xlu0 %685
          %687 = vrot.lane.b32.xlu0 %v682, 127
          %v688 = vpop.permute.xlu0 %687
          %vm689 = vcmask 1039360
          %v690 = vsel %vm689, %v684, %v686
          %v691 = vsel %vm689, %v686, %v688
          %v694 = vsel %vm668, %v690, 0.0
          %v695 = vsel %vm669, %v691, 0.0
          %v696 = vadd.f32 %v532, %v694
          %v697 = vadd.f32 %v533, %v695
          %s698 = sld [smem:[#allocation6 + $0x2]]
          %v699 = vstv %s698
          %v700 = vmul.f32 %v699, %v384
          %v701 = vadd.f32 %v700, 0.0
          %s702 = sld [smem:[#allocation6 + $0x33]]
          %v703 = vstv %s702
          %v704 = vmul.f32 %v703, %v396
          %v705 = vadd.f32 %v701, %v704
          %s706 = sld [smem:[#allocation6 + $0x9]]
          %v707 = vstv %s706
          %v708 = vmul.f32 %v707, %v384
          %710 = vrot.lane.b32.xlu0 %v708, 112
          %v711 = vpop.permute.xlu0 %710
          %v712 = vrot.slane %v711, 1
          %v713 = vsel %vm391, %v711, %v712
          %v715 = vadd.f32 %v705, %v713
          %s716 = sld [smem:[#allocation6 + $0x3a]]
          %v717 = vstv %s716
          %v718 = vmul.f32 %v717, %v396
          %720 = vrot.lane.b32.xlu0 %v718, 112
          %v721 = vpop.permute.xlu0 %720
          %v722 = vrot.slane %v721, 1
          %v723 = vsel %vm391, %v721, %v722
          %v725 = vadd.f32 %v715, %v723
          %s726 = sld [smem:[#allocation6 + $0x10]]
          %v727 = vstv %s726
          %v728 = vmul.f32 %v727, %v384
          %730 = vrot.lane.b32.xlu0 %v728, 96
          %v731 = vpop.permute.xlu0 %730
          %v732 = vrot.slane %v731, 1
          %v733 = vsel %vm413, %v731, %v732
          %v735 = vadd.f32 %v725, %v733
          %s736 = sld [smem:[#allocation6 + $0x41]]
          %v737 = vstv %s736
          %v738 = vmul.f32 %v737, %v396
          %740 = vrot.lane.b32.xlu0 %v738, 96
          %v741 = vpop.permute.xlu0 %740
          %v742 = vrot.slane %v741, 1
          %v743 = vsel %vm413, %v741, %v742
          %v745 = vadd.f32 %v735, %v743
          %s746 = sld [smem:[#allocation6 + $0x17]]
          %v747 = vstv %s746
          %v748 = vmul.f32 %v747, %v384
          %750 = vrot.lane.b32.xlu0 %v748, 80
          %v751 = vpop.permute.xlu0 %750
          %v752 = vrot.slane %v751, 1
          %v753 = vsel %vm434, %v751, %v752
          %v755 = vadd.f32 %v745, %v753
          %s756 = sld [smem:[#allocation6 + $0x48]]
          %v757 = vstv %s756
          %v758 = vmul.f32 %v757, %v396
          %760 = vrot.lane.b32.xlu0 %v758, 80
          %v761 = vpop.permute.xlu0 %760
          %v762 = vrot.slane %v761, 1
          %v763 = vsel %vm434, %v761, %v762
          %v765 = vadd.f32 %v755, %v763
          %s766 = sld [smem:[#allocation6 + $0x1e]]
          %v767 = vstv %s766
          %v768 = vmul.f32 %v767, %v384
          %770 = vrot.lane.b32.xlu0 %v768, 64
          %v771 = vpop.permute.xlu0 %770
          %v772 = vrot.slane %v771, 1
          %v773 = vsel %vm455, %v771, %v772
          %v775 = vadd.f32 %v765, %v773
          %s776 = sld [smem:[#allocation6 + $0x4f]]
          %v777 = vstv %s776
          %v778 = vmul.f32 %v777, %v396
          %780 = vrot.lane.b32.xlu0 %v778, 64
          %v781 = vpop.permute.xlu0 %780
          %v782 = vrot.slane %v781, 1
          %v783 = vsel %vm455, %v781, %v782
          %v785 = vadd.f32 %v775, %v783
          %s786 = sld [smem:[#allocation6 + $0x25]]
          %v787 = vstv %s786
          %v788 = vmul.f32 %v787, %v384
          %790 = vrot.lane.b32.xlu0 %v788, 48
          %v791 = vpop.permute.xlu0 %790
          %v792 = vrot.slane %v791, 1
          %v793 = vsel %vm476, %v791, %v792
          %v795 = vadd.f32 %v785, %v793
          %s796 = sld [smem:[#allocation6 + $0x56]]
          %v797 = vstv %s796
          %v798 = vmul.f32 %v797, %v396
          %800 = vrot.lane.b32.xlu0 %v798, 48
          %v801 = vpop.permute.xlu0 %800
          %v802 = vrot.slane %v801, 1
          %v803 = vsel %vm476, %v801, %v802
          %v805 = vadd.f32 %v795, %v803
          %s806 = sld [smem:[#allocation6 + $0x2c]]
          %v807 = vstv %s806
          %v808 = vmul.f32 %v807, %v384
          %810 = vrot.lane.b32.xlu0 %v808, 32
          %v811 = vpop.permute.xlu0 %810
          %v812 = vrot.slane %v811, 1
          %v813 = vsel %vm497, %v811, %v812
          %v815 = vadd.f32 %v805, %v813
          %s816 = sld [smem:[#allocation6 + $0x5d]]
          %v817 = vstv %s816
          %v818 = vmul.f32 %v817, %v396
          %820 = vrot.lane.b32.xlu0 %v818, 32
          %v821 = vpop.permute.xlu0 %820
          %v822 = vrot.slane %v821, 1
          %v823 = vsel %vm497, %v821, %v822
          %v825 = vadd.f32 %v815, %v823
          %v826 = vadd.s32 %v371, 4294967295
          %v827 = vadd.s32 %v372, 4294967295
          %vm828 = vcmp.ge.s32.totalorder %v826, 0
          %vm829 = vcmp.ge.s32.totalorder %v827, 0
          %vm830 = vcmp.lt.s32.totalorder %v826, 16
          %vm831 = vcmp.lt.s32.totalorder %v827, 16
          %vm832 = vmand %vm828, %vm830
          %vm833 = vmand %vm829, %vm831
          %v835 = vlaneseq
          %v836 = vshrl.u32 %v835, 7
          %v837 = vsub.s32 0, %v836
          %v838 = vrot.slane %v825, %v837
          %v839 = vlaneseq
          %v840 = vshrl.u32 %v839, 7
          %v841 = vsub.s32 1, %v840
          %v842 = vrot.slane %v825, %v841
          %v843 = vlaneseq
          %v844 = vshrl.u32 %v843, 7
          %v845 = vsub.s32 2, %v844
          %v846 = vrot.slane %v825, %v845
          %847 = vrot.lane.b32.xlu0 %v838, 126
          %v848 = vpop.permute.xlu0 %847
          %849 = vrot.lane.b32.xlu0 %v842, 126
          %v850 = vpop.permute.xlu0 %849
          %851 = vrot.lane.b32.xlu0 %v846, 126
          %v852 = vpop.permute.xlu0 %851
          %vm853 = vcmask 1031168
          %v854 = vsel %vm853, %v848, %v850
          %v855 = vsel %vm853, %v850, %v852
          %v858 = vsel %vm832, %v854, 0.0
          %v859 = vsel %vm833, %v855, 0.0
          %v860 = vadd.f32 %v696, %v858
          %v861 = vadd.f32 %v697, %v859
          %s862 = sld [smem:[#allocation6 + $0x3]]
          %v863 = vstv %s862
          %v864 = vmul.f32 %v863, %v384
          %v865 = vadd.f32 %v864, 0.0
          %s866 = sld [smem:[#allocation6 + $0x34]]
          %v867 = vstv %s866
          %v868 = vmul.f32 %v867, %v396
          %v869 = vadd.f32 %v865, %v868
          %s870 = sld [smem:[#allocation6 + $0xa]]
          %v871 = vstv %s870
          %v872 = vmul.f32 %v871, %v384
          %874 = vrot.lane.b32.xlu0 %v872, 112
          %v875 = vpop.permute.xlu0 %874
          %v876 = vrot.slane %v875, 1
          %v877 = vsel %vm391, %v875, %v876
          %v879 = vadd.f32 %v869, %v877
          %s880 = sld [smem:[#allocation6 + $0x3b]]
          %v881 = vstv %s880
          %v882 = vmul.f32 %v881, %v396
          %884 = vrot.lane.b32.xlu0 %v882, 112
          %v885 = vpop.permute.xlu0 %884
          %v886 = vrot.slane %v885, 1
          %v887 = vsel %vm391, %v885, %v886
          %v889 = vadd.f32 %v879, %v887
          %s890 = sld [smem:[#allocation6 + $0x11]]
          %v891 = vstv %s890
          %v892 = vmul.f32 %v891, %v384
          %894 = vrot.lane.b32.xlu0 %v892, 96
          %v895 = vpop.permute.xlu0 %894
          %v896 = vrot.slane %v895, 1
          %v897 = vsel %vm413, %v895, %v896
          %v899 = vadd.f32 %v889, %v897
          %s900 = sld [smem:[#allocation6 + $0x42]]
          %v901 = vstv %s900
          %v902 = vmul.f32 %v901, %v396
          %904 = vrot.lane.b32.xlu0 %v902, 96
          %v905 = vpop.permute.xlu0 %904
          %v906 = vrot.slane %v905, 1
          %v907 = vsel %vm413, %v905, %v906
          %v909 = vadd.f32 %v899, %v907
          %s910 = sld [smem:[#allocation6 + $0x18]]
          %v911 = vstv %s910
          %v912 = vmul.f32 %v911, %v384
          %914 = vrot.lane.b32.xlu0 %v912, 80
          %v915 = vpop.permute.xlu0 %914
          %v916 = vrot.slane %v915, 1
          %v917 = vsel %vm434, %v915, %v916
          %v919 = vadd.f32 %v909, %v917
          %s920 = sld [smem:[#allocation6 + $0x49]]
          %v921 = vstv %s920
          %v922 = vmul.f32 %v921, %v396
          %924 = vrot.lane.b32.xlu0 %v922, 80
          %v925 = vpop.permute.xlu0 %924
          %v926 = vrot.slane %v925, 1
          %v927 = vsel %vm434, %v925, %v926
          %v929 = vadd.f32 %v919, %v927
          %s930 = sld [smem:[#allocation6 + $0x1f]]
          %v931 = vstv %s930
          %v932 = vmul.f32 %v931, %v384
          %934 = vrot.lane.b32.xlu0 %v932, 64
          %v935 = vpop.permute.xlu0 %934
          %v936 = vrot.slane %v935, 1
          %v937 = vsel %vm455, %v935, %v936
          %v939 = vadd.f32 %v929, %v937
          %s940 = sld [smem:[#allocation6 + $0x50]]
          %v941 = vstv %s940
          %v942 = vmul.f32 %v941, %v396
          %944 = vrot.lane.b32.xlu0 %v942, 64
          %v945 = vpop.permute.xlu0 %944
          %v946 = vrot.slane %v945, 1
          %v947 = vsel %vm455, %v945, %v946
          %v949 = vadd.f32 %v939, %v947
          %s950 = sld [smem:[#allocation6 + $0x26]]
          %v951 = vstv %s950
          %v952 = vmul.f32 %v951, %v384
          %954 = vrot.lane.b32.xlu0 %v952, 48
          %v955 = vpop.permute.xlu0 %954
          %v956 = vrot.slane %v955, 1
          %v957 = vsel %vm476, %v955, %v956
          %v959 = vadd.f32 %v949, %v957
          %s960 = sld [smem:[#allocation6 + $0x57]]
          %v961 = vstv %s960
          %v962 = vmul.f32 %v961, %v396
          %964 = vrot.lane.b32.xlu0 %v962, 48
          %v965 = vpop.permute.xlu0 %964
          %v966 = vrot.slane %v965, 1
          %v967 = vsel %vm476, %v965, %v966
          %v969 = vadd.f32 %v959, %v967
          %s970 = sld [smem:[#allocation6 + $0x2d]]
          %v971 = vstv %s970
          %v972 = vmul.f32 %v971, %v384
          %974 = vrot.lane.b32.xlu0 %v972, 32
          %v975 = vpop.permute.xlu0 %974
          %v976 = vrot.slane %v975, 1
          %v977 = vsel %vm497, %v975, %v976
          %v979 = vadd.f32 %v969, %v977
          %s980 = sld [smem:[#allocation6 + $0x5e]]
          %v981 = vstv %s980
          %v982 = vmul.f32 %v981, %v396
          %984 = vrot.lane.b32.xlu0 %v982, 32
          %v985 = vpop.permute.xlu0 %984
          %v986 = vrot.slane %v985, 1
          %v987 = vsel %vm497, %v985, %v986
          %v989 = vadd.f32 %v979, %v987
          %vm990 = vcmp.ge.s32.totalorder %v371, 0
          %vm991 = vcmp.ge.s32.totalorder %v372, 0
          %vm992 = vcmp.lt.s32.totalorder %v371, 16
          %vm993 = vcmp.lt.s32.totalorder %v372, 16
          %vm994 = vmand %vm990, %vm992
          %vm995 = vmand %vm991, %vm993
          %v997 = vlaneseq
          %v998 = vshrl.u32 %v997, 7
          %v999 = vsub.s32 0, %v998
          %v1000 = vrot.slane %v989, %v999
          %v1001 = vlaneseq
          %v1002 = vshrl.u32 %v1001, 7
          %v1003 = vsub.s32 1, %v1002
          %v1004 = vrot.slane %v989, %v1003
          %v1005 = vlaneseq
          %v1006 = vshrl.u32 %v1005, 7
          %v1007 = vsub.s32 2, %v1006
          %v1008 = vrot.slane %v989, %v1007
          %1009 = vrot.lane.b32.xlu0 %v1000, 125
          %v1010 = vpop.permute.xlu0 %1009
          %1011 = vrot.lane.b32.xlu0 %v1004, 125
          %v1012 = vpop.permute.xlu0 %1011
          %1013 = vrot.lane.b32.xlu0 %v1008, 125
          %v1014 = vpop.permute.xlu0 %1013
          %vm1015 = vcmask 1022976
          %v1016 = vsel %vm1015, %v1010, %v1012
          %v1017 = vsel %vm1015, %v1012, %v1014
          %v1020 = vsel %vm994, %v1016, 0.0
          %v1021 = vsel %vm995, %v1017, 0.0
          %v1022 = vadd.f32 %v860, %v1020
          %v1023 = vadd.f32 %v861, %v1021
          %s1024 = sld [smem:[#allocation6 + $0x4]]
          %v1025 = vstv %s1024
          %v1026 = vmul.f32 %v1025, %v384
          %v1027 = vadd.f32 %v1026, 0.0
          %s1028 = sld [smem:[#allocation6 + $0x35]]
          %v1029 = vstv %s1028
          %v1030 = vmul.f32 %v1029, %v396
          %v1031 = vadd.f32 %v1027, %v1030
          %s1032 = sld [smem:[#allocation6 + $0xb]]
          %v1033 = vstv %s1032
          %v1034 = vmul.f32 %v1033, %v384
          %1036 = vrot.lane.b32.xlu0 %v1034, 112
          %v1037 = vpop.permute.xlu0 %1036
          %v1038 = vrot.slane %v1037, 1
          %v1039 = vsel %vm391, %v1037, %v1038
          %v1041 = vadd.f32 %v1031, %v1039
          %s1042 = sld [smem:[#allocation6 + $0x3c]]
          %v1043 = vstv %s1042
          %v1044 = vmul.f32 %v1043, %v396
          %1046 = vrot.lane.b32.xlu0 %v1044, 112
          %v1047 = vpop.permute.xlu0 %1046
          %v1048 = vrot.slane %v1047, 1
          %v1049 = vsel %vm391, %v1047, %v1048
          %v1051 = vadd.f32 %v1041, %v1049
          %s1052 = sld [smem:[#allocation6 + $0x12]]
          %v1053 = vstv %s1052
          %v1054 = vmul.f32 %v1053, %v384
          %1056 = vrot.lane.b32.xlu0 %v1054, 96
          %v1057 = vpop.permute.xlu0 %1056
          %v1058 = vrot.slane %v1057, 1
          %v1059 = vsel %vm413, %v1057, %v1058
          %v1061 = vadd.f32 %v1051, %v1059
          %s1062 = sld [smem:[#allocation6 + $0x43]]
          %v1063 = vstv %s1062
          %v1064 = vmul.f32 %v1063, %v396
          %1066 = vrot.lane.b32.xlu0 %v1064, 96
          %v1067 = vpop.permute.xlu0 %1066
          %v1068 = vrot.slane %v1067, 1
          %v1069 = vsel %vm413, %v1067, %v1068
          %v1071 = vadd.f32 %v1061, %v1069
          %s1072 = sld [smem:[#allocation6 + $0x19]]
          %v1073 = vstv %s1072
          %v1074 = vmul.f32 %v1073, %v384
          %1076 = vrot.lane.b32.xlu0 %v1074, 80
          %v1077 = vpop.permute.xlu0 %1076
          %v1078 = vrot.slane %v1077, 1
          %v1079 = vsel %vm434, %v1077, %v1078
          %v1081 = vadd.f32 %v1071, %v1079
          %s1082 = sld [smem:[#allocation6 + $0x4a]]
          %v1083 = vstv %s1082
          %v1084 = vmul.f32 %v1083, %v396
          %1086 = vrot.lane.b32.xlu0 %v1084, 80
          %v1087 = vpop.permute.xlu0 %1086
          %v1088 = vrot.slane %v1087, 1
          %v1089 = vsel %vm434, %v1087, %v1088
          %v1091 = vadd.f32 %v1081, %v1089
          %s1092 = sld [smem:[#allocation6 + $0x20]]
          %v1093 = vstv %s1092
          %v1094 = vmul.f32 %v1093, %v384
          %1096 = vrot.lane.b32.xlu0 %v1094, 64
          %v1097 = vpop.permute.xlu0 %1096
          %v1098 = vrot.slane %v1097, 1
          %v1099 = vsel %vm455, %v1097, %v1098
          %v1101 = vadd.f32 %v1091, %v1099
          %s1102 = sld [smem:[#allocation6 + $0x51]]
          %v1103 = vstv %s1102
          %v1104 = vmul.f32 %v1103, %v396
          %1106 = vrot.lane.b32.xlu0 %v1104, 64
          %v1107 = vpop.permute.xlu0 %1106
          %v1108 = vrot.slane %v1107, 1
          %v1109 = vsel %vm455, %v1107, %v1108
          %v1111 = vadd.f32 %v1101, %v1109
          %s1112 = sld [smem:[#allocation6 + $0x27]]
          %v1113 = vstv %s1112
          %v1114 = vmul.f32 %v1113, %v384
          %1116 = vrot.lane.b32.xlu0 %v1114, 48
          %v1117 = vpop.permute.xlu0 %1116
          %v1118 = vrot.slane %v1117, 1
          %v1119 = vsel %vm476, %v1117, %v1118
          %v1121 = vadd.f32 %v1111, %v1119
          %s1122 = sld [smem:[#allocation6 + $0x58]]
          %v1123 = vstv %s1122
          %v1124 = vmul.f32 %v1123, %v396
          %1126 = vrot.lane.b32.xlu0 %v1124, 48
          %v1127 = vpop.permute.xlu0 %1126
          %v1128 = vrot.slane %v1127, 1
          %v1129 = vsel %vm476, %v1127, %v1128
          %v1131 = vadd.f32 %v1121, %v1129
          %s1132 = sld [smem:[#allocation6 + $0x2e]]
          %v1133 = vstv %s1132
          %v1134 = vmul.f32 %v1133, %v384
          %1136 = vrot.lane.b32.xlu0 %v1134, 32
          %v1137 = vpop.permute.xlu0 %1136
          %v1138 = vrot.slane %v1137, 1
          %v1139 = vsel %vm497, %v1137, %v1138
          %v1141 = vadd.f32 %v1131, %v1139
          %s1142 = sld [smem:[#allocation6 + $0x5f]]
          %v1143 = vstv %s1142
          %v1144 = vmul.f32 %v1143, %v396
          %1146 = vrot.lane.b32.xlu0 %v1144, 32
          %v1147 = vpop.permute.xlu0 %1146
          %v1148 = vrot.slane %v1147, 1
          %v1149 = vsel %vm497, %v1147, %v1148
          %v1151 = vadd.f32 %v1141, %v1149
          %v1152 = vadd.s32 %v371, 1
          %v1153 = vadd.s32 %v372, 1
          %vm1154 = vcmp.ge.s32.totalorder %v1152, 0
          %vm1155 = vcmp.ge.s32.totalorder %v1153, 0
          %vm1156 = vcmp.lt.s32.totalorder %v1152, 16
          %vm1157 = vcmp.lt.s32.totalorder %v1153, 16
          %vm1158 = vmand %vm1154, %vm1156
          %vm1159 = vmand %vm1155, %vm1157
          %v1161 = vlaneseq
          %v1162 = vshrl.u32 %v1161, 7
          %v1163 = vsub.s32 0, %v1162
          %v1164 = vrot.slane %v1151, %v1163
          %v1165 = vlaneseq
          %v1166 = vshrl.u32 %v1165, 7
          %v1167 = vsub.s32 1, %v1166
          %v1168 = vrot.slane %v1151, %v1167
          %v1169 = vlaneseq
          %v1170 = vshrl.u32 %v1169, 7
          %v1171 = vsub.s32 2, %v1170
          %v1172 = vrot.slane %v1151, %v1171
          %1173 = vrot.lane.b32.xlu0 %v1164, 124
          %v1174 = vpop.permute.xlu0 %1173
          %1175 = vrot.lane.b32.xlu0 %v1168, 124
          %v1176 = vpop.permute.xlu0 %1175
          %1177 = vrot.lane.b32.xlu0 %v1172, 124
          %v1178 = vpop.permute.xlu0 %1177
          %vm1179 = vcmask 1014784
          %v1180 = vsel %vm1179, %v1174, %v1176
          %v1181 = vsel %vm1179, %v1176, %v1178
          %v1184 = vsel %vm1158, %v1180, 0.0
          %v1185 = vsel %vm1159, %v1181, 0.0
          %v1186 = vadd.f32 %v1022, %v1184
          %v1187 = vadd.f32 %v1023, %v1185
          %s1188 = sld [smem:[#allocation6 + $0x5]]
          %v1189 = vstv %s1188
          %v1190 = vmul.f32 %v1189, %v384
          %v1191 = vadd.f32 %v1190, 0.0
          %s1192 = sld [smem:[#allocation6 + $0x36]]
          %v1193 = vstv %s1192
          %v1194 = vmul.f32 %v1193, %v396
          %v1195 = vadd.f32 %v1191, %v1194
          %s1196 = sld [smem:[#allocation6 + $0xc]]
          %v1197 = vstv %s1196
          %v1198 = vmul.f32 %v1197, %v384
          %1200 = vrot.lane.b32.xlu0 %v1198, 112
          %v1201 = vpop.permute.xlu0 %1200
          %v1202 = vrot.slane %v1201, 1
          %v1203 = vsel %vm391, %v1201, %v1202
          %v1205 = vadd.f32 %v1195, %v1203
          %s1206 = sld [smem:[#allocation6 + $0x3d]]
          %v1207 = vstv %s1206
          %v1208 = vmul.f32 %v1207, %v396
          %1210 = vrot.lane.b32.xlu0 %v1208, 112
          %v1211 = vpop.permute.xlu0 %1210
          %v1212 = vrot.slane %v1211, 1
          %v1213 = vsel %vm391, %v1211, %v1212
          %v1215 = vadd.f32 %v1205, %v1213
          %s1216 = sld [smem:[#allocation6 + $0x13]]
          %v1217 = vstv %s1216
          %v1218 = vmul.f32 %v1217, %v384
          %1220 = vrot.lane.b32.xlu0 %v1218, 96
          %v1221 = vpop.permute.xlu0 %1220
          %v1222 = vrot.slane %v1221, 1
          %v1223 = vsel %vm413, %v1221, %v1222
          %v1225 = vadd.f32 %v1215, %v1223
          %s1226 = sld [smem:[#allocation6 + $0x44]]
          %v1227 = vstv %s1226
          %v1228 = vmul.f32 %v1227, %v396
          %1230 = vrot.lane.b32.xlu0 %v1228, 96
          %v1231 = vpop.permute.xlu0 %1230
          %v1232 = vrot.slane %v1231, 1
          %v1233 = vsel %vm413, %v1231, %v1232
          %v1235 = vadd.f32 %v1225, %v1233
          %s1236 = sld [smem:[#allocation6 + $0x1a]]
          %v1237 = vstv %s1236
          %v1238 = vmul.f32 %v1237, %v384
          %1240 = vrot.lane.b32.xlu0 %v1238, 80
          %v1241 = vpop.permute.xlu0 %1240
          %v1242 = vrot.slane %v1241, 1
          %v1243 = vsel %vm434, %v1241, %v1242
          %v1245 = vadd.f32 %v1235, %v1243
          %s1246 = sld [smem:[#allocation6 + $0x4b]]
          %v1247 = vstv %s1246
          %v1248 = vmul.f32 %v1247, %v396
          %1250 = vrot.lane.b32.xlu0 %v1248, 80
          %v1251 = vpop.permute.xlu0 %1250
          %v1252 = vrot.slane %v1251, 1
          %v1253 = vsel %vm434, %v1251, %v1252
          %v1255 = vadd.f32 %v1245, %v1253
          %s1256 = sld [smem:[#allocation6 + $0x21]]
          %v1257 = vstv %s1256
          %v1258 = vmul.f32 %v1257, %v384
          %1260 = vrot.lane.b32.xlu0 %v1258, 64
          %v1261 = vpop.permute.xlu0 %1260
          %v1262 = vrot.slane %v1261, 1
          %v1263 = vsel %vm455, %v1261, %v1262
          %v1265 = vadd.f32 %v1255, %v1263
          %s1266 = sld [smem:[#allocation6 + $0x52]]
          %v1267 = vstv %s1266
          %v1268 = vmul.f32 %v1267, %v396
          %1270 = vrot.lane.b32.xlu0 %v1268, 64
          %v1271 = vpop.permute.xlu0 %1270
          %v1272 = vrot.slane %v1271, 1
          %v1273 = vsel %vm455, %v1271, %v1272
          %v1275 = vadd.f32 %v1265, %v1273
          %s1276 = sld [smem:[#allocation6 + $0x28]]
          %v1277 = vstv %s1276
          %v1278 = vmul.f32 %v1277, %v384
          %1280 = vrot.lane.b32.xlu0 %v1278, 48
          %v1281 = vpop.permute.xlu0 %1280
          %v1282 = vrot.slane %v1281, 1
          %v1283 = vsel %vm476, %v1281, %v1282
          %v1285 = vadd.f32 %v1275, %v1283
          %s1286 = sld [smem:[#allocation6 + $0x59]]
          %v1287 = vstv %s1286
          %v1288 = vmul.f32 %v1287, %v396
          %1290 = vrot.lane.b32.xlu0 %v1288, 48
          %v1291 = vpop.permute.xlu0 %1290
          %v1292 = vrot.slane %v1291, 1
          %v1293 = vsel %vm476, %v1291, %v1292
          %v1295 = vadd.f32 %v1285, %v1293
          %s1296 = sld [smem:[#allocation6 + $0x2f]]
          %v1297 = vstv %s1296
          %v1298 = vmul.f32 %v1297, %v384
          %1300 = vrot.lane.b32.xlu0 %v1298, 32
          %v1301 = vpop.permute.xlu0 %1300
          %v1302 = vrot.slane %v1301, 1
          %v1303 = vsel %vm497, %v1301, %v1302
          %v1305 = vadd.f32 %v1295, %v1303
          %s1306 = sld [smem:[#allocation6 + $0x60]]
          %v1307 = vstv %s1306
          %v1308 = vmul.f32 %v1307, %v396
          %1310 = vrot.lane.b32.xlu0 %v1308, 32
          %v1311 = vpop.permute.xlu0 %1310
          %v1312 = vrot.slane %v1311, 1
          %v1313 = vsel %vm497, %v1311, %v1312
          %v1315 = vadd.f32 %v1305, %v1313
          %v1316 = vadd.s32 %v371, 2
          %v1317 = vadd.s32 %v372, 2
          %vm1318 = vcmp.ge.s32.totalorder %v1316, 0
          %vm1319 = vcmp.ge.s32.totalorder %v1317, 0
          %vm1320 = vcmp.lt.s32.totalorder %v1316, 16
          %vm1321 = vcmp.lt.s32.totalorder %v1317, 16
          %vm1322 = vmand %vm1318, %vm1320
          %vm1323 = vmand %vm1319, %vm1321
          %v1325 = vlaneseq
          %v1326 = vshrl.u32 %v1325, 7
          %v1327 = vsub.s32 0, %v1326
          %v1328 = vrot.slane %v1315, %v1327
          %v1329 = vlaneseq
          %v1330 = vshrl.u32 %v1329, 7
          %v1331 = vsub.s32 1, %v1330
          %v1332 = vrot.slane %v1315, %v1331
          %v1333 = vlaneseq
          %v1334 = vshrl.u32 %v1333, 7
          %v1335 = vsub.s32 2, %v1334
          %v1336 = vrot.slane %v1315, %v1335
          %1337 = vrot.lane.b32.xlu0 %v1328, 123
          %v1338 = vpop.permute.xlu0 %1337
          %1339 = vrot.lane.b32.xlu0 %v1332, 123
          %v1340 = vpop.permute.xlu0 %1339
          %1341 = vrot.lane.b32.xlu0 %v1336, 123
          %v1342 = vpop.permute.xlu0 %1341
          %vm1343 = vcmask 1006592
          %v1344 = vsel %vm1343, %v1338, %v1340
          %v1345 = vsel %vm1343, %v1340, %v1342
          %v1348 = vsel %vm1322, %v1344, 0.0
          %v1349 = vsel %vm1323, %v1345, 0.0
          %v1350 = vadd.f32 %v1186, %v1348
          %v1351 = vadd.f32 %v1187, %v1349
          %s1352 = sld [smem:[#allocation6 + $0x6]]
          %v1353 = vstv %s1352
          %v1354 = vmul.f32 %v1353, %v384
          %v1355 = vadd.f32 %v1354, 0.0
          %s1356 = sld [smem:[#allocation6 + $0x37]]
          %v1357 = vstv %s1356
          %v1358 = vmul.f32 %v1357, %v396
          %v1359 = vadd.f32 %v1355, %v1358
          %s1360 = sld [smem:[#allocation6 + $0xd]]
          %v1361 = vstv %s1360
          %v1362 = vmul.f32 %v1361, %v384
          %1364 = vrot.lane.b32.xlu0 %v1362, 112
          %v1365 = vpop.permute.xlu0 %1364
          %v1366 = vrot.slane %v1365, 1
          %v1367 = vsel %vm391, %v1365, %v1366
          %v1369 = vadd.f32 %v1359, %v1367
          %s1370 = sld [smem:[#allocation6 + $0x3e]]
          %v1371 = vstv %s1370
          %v1372 = vmul.f32 %v1371, %v396
          %1374 = vrot.lane.b32.xlu0 %v1372, 112
          %v1375 = vpop.permute.xlu0 %1374
          %v1376 = vrot.slane %v1375, 1
          %v1377 = vsel %vm391, %v1375, %v1376
          %v1379 = vadd.f32 %v1369, %v1377
          %s1380 = sld [smem:[#allocation6 + $0x14]]
          %v1381 = vstv %s1380
          %v1382 = vmul.f32 %v1381, %v384
          %1384 = vrot.lane.b32.xlu0 %v1382, 96
          %v1385 = vpop.permute.xlu0 %1384
          %v1386 = vrot.slane %v1385, 1
          %v1387 = vsel %vm413, %v1385, %v1386
          %v1389 = vadd.f32 %v1379, %v1387
          %s1390 = sld [smem:[#allocation6 + $0x45]]
          %v1391 = vstv %s1390
          %v1392 = vmul.f32 %v1391, %v396
          %1394 = vrot.lane.b32.xlu0 %v1392, 96
          %v1395 = vpop.permute.xlu0 %1394
          %v1396 = vrot.slane %v1395, 1
          %v1397 = vsel %vm413, %v1395, %v1396
          %v1399 = vadd.f32 %v1389, %v1397
          %s1400 = sld [smem:[#allocation6 + $0x1b]]
          %v1401 = vstv %s1400
          %v1402 = vmul.f32 %v1401, %v384
          %1404 = vrot.lane.b32.xlu0 %v1402, 80
          %v1405 = vpop.permute.xlu0 %1404
          %v1406 = vrot.slane %v1405, 1
          %v1407 = vsel %vm434, %v1405, %v1406
          %v1409 = vadd.f32 %v1399, %v1407
          %s1410 = sld [smem:[#allocation6 + $0x4c]]
          %v1411 = vstv %s1410
          %v1412 = vmul.f32 %v1411, %v396
          %1414 = vrot.lane.b32.xlu0 %v1412, 80
          %v1415 = vpop.permute.xlu0 %1414
          %v1416 = vrot.slane %v1415, 1
          %v1417 = vsel %vm434, %v1415, %v1416
          %v1419 = vadd.f32 %v1409, %v1417
          %s1420 = sld [smem:[#allocation6 + $0x22]]
          %v1421 = vstv %s1420
          %v1422 = vmul.f32 %v1421, %v384
          %1424 = vrot.lane.b32.xlu0 %v1422, 64
          %v1425 = vpop.permute.xlu0 %1424
          %v1426 = vrot.slane %v1425, 1
          %v1427 = vsel %vm455, %v1425, %v1426
          %v1429 = vadd.f32 %v1419, %v1427
          %s1430 = sld [smem:[#allocation6 + $0x53]]
          %v1431 = vstv %s1430
          %v1432 = vmul.f32 %v1431, %v396
          %1434 = vrot.lane.b32.xlu0 %v1432, 64
          %v1435 = vpop.permute.xlu0 %1434
          %v1436 = vrot.slane %v1435, 1
          %v1437 = vsel %vm455, %v1435, %v1436
          %v1439 = vadd.f32 %v1429, %v1437
          %s1440 = sld [smem:[#allocation6 + $0x29]]
          %v1441 = vstv %s1440
          %v1442 = vmul.f32 %v1441, %v384
          %1444 = vrot.lane.b32.xlu0 %v1442, 48
          %v1445 = vpop.permute.xlu0 %1444
          %v1446 = vrot.slane %v1445, 1
          %v1447 = vsel %vm476, %v1445, %v1446
          %v1449 = vadd.f32 %v1439, %v1447
          %s1450 = sld [smem:[#allocation6 + $0x5a]]
          %v1451 = vstv %s1450
          %v1452 = vmul.f32 %v1451, %v396
          %1454 = vrot.lane.b32.xlu0 %v1452, 48
          %v1455 = vpop.permute.xlu0 %1454
          %v1456 = vrot.slane %v1455, 1
          %v1457 = vsel %vm476, %v1455, %v1456
          %v1459 = vadd.f32 %v1449, %v1457
          %s1460 = sld [smem:[#allocation6 + $0x30]]
          %v1461 = vstv %s1460
          %v1462 = vmul.f32 %v1461, %v384
          %1464 = vrot.lane.b32.xlu0 %v1462, 32
          %v1465 = vpop.permute.xlu0 %1464
          %v1466 = vrot.slane %v1465, 1
          %v1467 = vsel %vm497, %v1465, %v1466
          %v1469 = vadd.f32 %v1459, %v1467
          %s1470 = sld [smem:[#allocation6 + $0x61]]
          %v1471 = vstv %s1470
          %v1472 = vmul.f32 %v1471, %v396
          %1474 = vrot.lane.b32.xlu0 %v1472, 32
          %v1475 = vpop.permute.xlu0 %1474
          %v1476 = vrot.slane %v1475, 1
          %v1477 = vsel %vm497, %v1475, %v1476
          %v1479 = vadd.f32 %v1469, %v1477
          %v1480 = vadd.s32 %v371, 3
          %v1481 = vadd.s32 %v372, 3
          %vm1482 = vcmp.ge.s32.totalorder %v1480, 0
          %vm1483 = vcmp.ge.s32.totalorder %v1481, 0
          %vm1484 = vcmp.lt.s32.totalorder %v1480, 16
          %vm1485 = vcmp.lt.s32.totalorder %v1481, 16
          %vm1486 = vmand %vm1482, %vm1484
          %vm1487 = vmand %vm1483, %vm1485
          %v1489 = vlaneseq
          %v1490 = vshrl.u32 %v1489, 7
          %v1491 = vsub.s32 0, %v1490
          %v1492 = vrot.slane %v1479, %v1491
          %v1493 = vlaneseq
          %v1494 = vshrl.u32 %v1493, 7
          %v1495 = vsub.s32 1, %v1494
          %v1496 = vrot.slane %v1479, %v1495
          %v1497 = vlaneseq
          %v1498 = vshrl.u32 %v1497, 7
          %v1499 = vsub.s32 2, %v1498
          %v1500 = vrot.slane %v1479, %v1499
          %1501 = vrot.lane.b32.xlu0 %v1492, 122
          %v1502 = vpop.permute.xlu0 %1501
          %1503 = vrot.lane.b32.xlu0 %v1496, 122
          %v1504 = vpop.permute.xlu0 %1503
          %1505 = vrot.lane.b32.xlu0 %v1500, 122
          %v1506 = vpop.permute.xlu0 %1505
          %vm1507 = vcmask 998400
          %v1508 = vsel %vm1507, %v1502, %v1504
          %v1509 = vsel %vm1507, %v1504, %v1506
          %v1512 = vsel %vm1486, %v1508, 0.0
          %v1513 = vsel %vm1487, %v1509, 0.0
          %v1514 = vadd.f32 %v1350, %v1512
          %v1515 = vadd.f32 %v1351, %v1513
          %v1516 = vxor.u32 %v1514, 2147483648
          %v1517 = vxor.u32 %v1515, 2147483648
          %v1518 = vmul.f32 %v1516, 1.442695
          %v1519 = vpow.pop %v1518
          %v1520 = vmul.f32 %v1517, 1.442695
          %v1521 = vpow.pop %v1520
          %v1522 = vadd.f32 %v1519, 1.0
          %v1523 = vadd.f32 %v1521, 1.0
          %v1524 = vrcp.pop %v1522
          %v1525 = vmul.f32 1.0, %v1524
          %v1526 = vrcp.pop %v1523
          %v1527 = vmul.f32 1.0, %v1526
          %v1530 = vcombine.low %v1525, %v1527
          %v1532 = vunpack.c.l.s4 1966171168
          %v1533 = vunpack.c.0.s8 %v1532
          %v1534 = vlaneseq
          %v1535 = vshrl.u32 %v1534, 7
          %v1536 = vsub.s32 %v1533, %v1535
          %v1537 = vrot.slane %v1530, %v1536
          %v1539 = vunpack.c.l.s4 1966171168
          %v1540 = vunpack.c.0.s8 %v1539
          %v1541 = vlaneseq
          %v1542 = vshrl.u32 %v1541, 7
          %v1543 = vsub.s32 %v1540, %v1542
          %v1544 = vrot.slane %v1537, %v1543
          %vm1546 = vcmp.ge.s32.totalorder %v333, 0
          %vm1547 = vcmp.lt.s32.totalorder %v333, 256
          %vm1548 = vmand %vm1546, %vm1547
          %1549 = vst.msk [vmem:[%s187] sm:$0x3] %vm1548, %v1544
        $region48: #{tpu_custom_call.1} parent=27 // pred_fallthru
          _
        %s1550 = sand.u32 %s89, 1
        %s1551 = scalar_lea.sflag [#allocation8], %s1550
        %s1552 = sand.u32 %s89, 1
        %s1553 = smul.addr %s1552, 2
        %s1554 = scalar_lea.vmem [#allocation11], %s1553
        // Predicated region
        $region49: #{tpu_custom_call.1} parent=27 // pred_check
          %p1555 = pneg %p99
        $region50: #{tpu_custom_call.1} parent=27 // pred_check_branch
          %1557 = sbr.rel (%p1555) target = $region52
        $region51: #{tpu_custom_call.1} parent=27 // pred_region
          %s1559 = ssub.s32 32, 32
          %1560 = vsyncadd %s1551, %s1559
          %s1561 = smul.addr %s24, 2
          %s1562 = smul.addr %s1561, 16
          %s1563 = scalar_lea.hbm %s2, %s1562
          %s1565 = sshll.u32 %s1554, 4
          %s1566 = int_to_ptr.vmem [resolvable:$true] %s1565
          %1568 = dma.vmem_to_hbm [thread:$0]  %s1566, 32, %s1563, %s1551
        $region52: #{tpu_custom_call.1} parent=27 // pred_fallthru
          _
      $region28: #{tpu_custom_call.1} parent=5 // pred_fallthru
        _
      %p1569 = scmp.le.s32.totalorder 2, %s15
      // Predicated region
      $region53: #{tpu_custom_call.1} parent=5 // pred_check
        %p1570 = pneg %p1569
      $region54: #{tpu_custom_call.1} parent=5 // pred_check_branch
        %1572 = sbr.rel (%p1570) target = $region56
      $region55: #{tpu_custom_call.1} parent=5 // pred_region
        %s1573 = ssub.s32 %s15, 2
        // Predicated region
        $region57: #{tpu_custom_call.1} parent=55 // pred_check
          %p1574 = pneg %p105
        $region58: #{tpu_custom_call.1} parent=55 // pred_check_branch
          %1576 = sbr.rel (%p1574) target = $region60
        $region59: #{tpu_custom_call.1} parent=55 // pred_region
          %s1577 = sand.u32 %s90, 1
          %s1578 = scalar_lea.sflag [#allocation8], %s1577
          %s1579 = sand.u32 %s90, 1
          %s1580 = smul.addr %s1579, 2
          %s1581 = scalar_lea.vmem [#allocation11], %s1580
          %1582 = dma.done %s1578, 32
        $region60: #{tpu_custom_call.1} parent=55 // pred_fallthru
          _
      $region56: #{tpu_custom_call.1} parent=5 // pred_fallthru
        _
    $region6: #{tpu_custom_call.1} parent=1 // loop_footer
      %s19 = sadd.s32 1, %s15
    $region7: #{tpu_custom_call.1} parent=1 // loop_footer_branch
      %14 = sbr.rel target = $region3
    $region8: #{tpu_custom_call.1} parent=1 // loop_exit
      _
    %1583 = vsyncpa [#allocation7], 1
    %s1584 = scalar_lea.sflag [#allocation7], 1
    %1585 = vsyncpa %s1584, 1
    %1586 = vsyncpa [#allocation8], 1
    %s1587 = scalar_lea.sflag [#allocation8], 1
    %1588 = vsyncpa %s1587, 1
    %1589 = vsyncpa [#allocation9], 1
    %s1590 = scalar_lea.sflag [#allocation9], 1
    %1591 = vsyncpa %s1590, 1

</llo_original>
